<compile_context>
chip_gen: v7x
topology: tpu7x:2x2x1
jax: 0.10.0
libtpu: 0.0.40
codegen_flags: <defaults>
</compile_context>

<pallas_src>
import jax
import jax.numpy as jnp
from jax import lax
from jax.experimental import pallas as pl
from jax.experimental.pallas import tpu as pltpu

# Small, module-consistent shapes
BATCH = 2
SEQ = 8
HIDDEN = 32
N_HEADS = 4
HEAD_DIM = HIDDEN // N_HEADS
PF_DIM = 64
EPS = 1e-5  # nn.LayerNorm default
INV_SCALE = 1.0 / float(HEAD_DIM) ** 0.5

# Row offsets inside the packed weight slab w_all ([4H + PF + 9, H]):
_WQ, _WK, _WV, _WO = 0, HIDDEN, 2 * HIDDEN, 3 * HIDDEN
_W2 = 4 * HIDDEN
_PV = 4 * HIDDEN + PF_DIM          # start of the 9 packed [1, H] param vectors
# row order inside the packed-vector block:
_BQ, _BK, _BV, _BO, _LN1G, _LN1B, _B2, _LN2G, _LN2B = range(9)
W_ALL_ROWS = _PV + 9               # 201


def encoder_layer_kernel(x_ref, w_ref, w1b_ref, bias_ref, out_ref):
    x = x_ref[...]                                          # [B*S, H]

    pv = w_ref[_PV:_PV + 9, :]                              # [9, H] packed vectors
    bq, bk, bv = pv[_BQ:_BQ + 1], pv[_BK:_BK + 1], pv[_BV:_BV + 1]
    bo, ln1_g, ln1_b = pv[_BO:_BO + 1], pv[_LN1G:_LN1G + 1], pv[_LN1B:_LN1B + 1]
    b2, ln2_g, ln2_b = pv[_B2:_B2 + 1], pv[_LN2G:_LN2G + 1], pv[_LN2B:_LN2B + 1]

    # --- Q/K/V projections (1/sqrt(head_dim) already folded into wq / bq) ---
    q = jnp.dot(x, w_ref[_WQ:_WQ + HIDDEN, :], preferred_element_type=jnp.float32) + bq
    k = jnp.dot(x, w_ref[_WK:_WK + HIDDEN, :], preferred_element_type=jnp.float32) + bk
    v = jnp.dot(x, w_ref[_WV:_WV + HIDDEN, :], preferred_element_type=jnp.float32) + bv

    # --- head split without transposes: [B*S, H] -> [NH*B, S, D], idx = h*B + b ---
    def split_heads(t):
        t3 = t.reshape(BATCH, SEQ, HIDDEN)
        return jnp.concatenate(
            [t3[:, :, h * HEAD_DIM:(h + 1) * HEAD_DIM] for h in range(N_HEADS)],
            axis=0)

    qh, kh, vh = split_heads(q), split_heads(k), split_heads(v)

    # --- head-batched attention: one matmul pair + one softmax ---
    energy = jnp.einsum('bqd,bkd->bqk', qh, kh,
                        preferred_element_type=jnp.float32)        # [NH*B, S, S]
    # additive key-mask bias (precomputed in wrapper), broadcast per collapsed batch
    bias2 = bias_ref[...]                                           # [B, S]
    brow = [bias2[b:b + 1, :][None] for b in range(BATCH)]          # each [1, 1, S]
    energy = energy + jnp.concatenate(brow * N_HEADS, axis=0)       # [NH*B, 1, S]

    m = jnp.max(energy, axis=-1, keepdims=True)
    p = jnp.exp(energy - m)
    attn = p / jnp.sum(p, axis=-1, keepdims=True)   # exact softmax (no approx recip)
    # TODO(synk): dropout(attention) / residual dropouts are identity (inference).
    ctx_h = jnp.einsum('bqk,bkd->bqd', attn, vh,
                       preferred_element_type=jnp.float32)          # [NH*B, S, D]

    # merge heads back: leading-dim slices + one lane concat -> [B*S, H]
    ctx = jnp.concatenate(
        [ctx_h[h * BATCH:(h + 1) * BATCH] for h in range(N_HEADS)], axis=-1
    ).reshape(BATCH * SEQ, HIDDEN)

    attn_out = jnp.dot(ctx, w_ref[_WO:_WO + HIDDEN, :],
                       preferred_element_type=jnp.float32) + bo

    # --- residual + LayerNorm 1 ---
    r1 = x + attn_out
    mu1 = jnp.mean(r1, axis=-1, keepdims=True)
    var1 = jnp.mean((r1 - mu1) ** 2, axis=-1, keepdims=True)
    y1 = (r1 - mu1) * lax.rsqrt(var1 + EPS) * ln1_g + ln1_b

    # --- positionwise feedforward ---
    w1 = w1b_ref[0:HIDDEN, :]
    b1 = w1b_ref[HIDDEN:HIDDEN + 1, :]
    h1 = jnp.maximum(jnp.dot(y1, w1, preferred_element_type=jnp.float32) + b1, 0.0)
    ff = jnp.dot(h1, w_ref[_W2:_W2 + PF_DIM, :],
                 preferred_element_type=jnp.float32) + b2

    # --- residual + LayerNorm 2 ---
    r2 = y1 + ff
    mu2 = jnp.mean(r2, axis=-1, keepdims=True)
    var2 = jnp.mean((r2 - mu2) ** 2, axis=-1, keepdims=True)
    out_ref[...] = (r2 - mu2) * lax.rsqrt(var2 + EPS) * ln2_g + ln2_b


def pack_params(params):
    """One-time packing of the 16 PyTorch-style parameters into two slabs.

    Folds the 1/sqrt(head_dim) attention scale into wq/bq so the kernel needs
    no separate q-scaling.  Run once at init, NOT per call.
    """
    (wq, bq, wk, bk, wv, bv, wo, bo, ln1_g, ln1_b,
     w1, b1, w2, b2, ln2_g, ln2_b) = params
    w_all = jnp.concatenate(
        [wq * INV_SCALE, wk, wv, wo, w2,
         bq * INV_SCALE, bk, bv, bo, ln1_g, ln1_b, b2, ln2_g, ln2_b], axis=0)
    assert w_all.shape == (W_ALL_ROWS, HIDDEN)
    w1b = jnp.concatenate([w1, b1], axis=0)                 # [H+1, PF]
    return w_all, w1b


@jax.jit
def encoder_layer(src, src_mask, w_all, w1b):
    B, S, H = src.shape
    x2d = src.reshape(B * S, H)
    # Only per-call prep: additive key-mask bias (16 floats); removes the
    # compare+select (and the mask's exact-0.0 fragility) from the kernel.
    bias = jnp.where(src_mask == 0.0, jnp.float32(-1e10), jnp.float32(0.0))

    full = lambda shape: pl.BlockSpec(shape, lambda i: (0,) * len(shape))

    out2d = pl.pallas_call(
        encoder_layer_kernel,
        out_shape=jax.ShapeDtypeStruct((B * S, H), jnp.float32),
        grid_spec=pltpu.PrefetchScalarGridSpec(
            num_scalar_prefetch=0,
            # Single grid step: whole layer in one invocation (no per-step
            # overhead).  TODO(synk): when B*S grows, add a "parallel" row-tile
            # axis to use both TensorCores on v7x.
            grid=(1,),
            in_specs=[
                full((B * S, H)),          # activations
                full((W_ALL_ROWS, H)),     # wq*scale | wk | wv | wo | w2 | 9 vectors
                full((H + 1, PF_DIM)),     # w1 | b1
                full((B, S)),              # precomputed additive mask bias
            ],
            out_specs=full((B * S, H)),
        ),
        compiler_params=pltpu.CompilerParams(
            dimension_semantics=("arbitrary",)),
    )(x2d, w_all, w1b, bias)
    return out2d.reshape(B, S, H)


def make_params(key):
    ks = jax.random.split(key, 8)
    scale = 0.05
    wq = scale * jax.random.normal(ks[0], (HIDDEN, HIDDEN), jnp.float32)
    wk = scale * jax.random.normal(ks[1], (HIDDEN, HIDDEN), jnp.float32)
    wv = scale * jax.random.normal(ks[2], (HIDDEN, HIDDEN), jnp.float32)
    wo = scale * jax.random.normal(ks[3], (HIDDEN, HIDDEN), jnp.float32)
    w1 = scale * jax.random.normal(ks[4], (HIDDEN, PF_DIM), jnp.float32)
    w2 = scale * jax.random.normal(ks[5], (PF_DIM, HIDDEN), jnp.float32)
    bq = 0.01 * jnp.ones((1, HIDDEN), jnp.float32)
    bk = 0.02 * jnp.ones((1, HIDDEN), jnp.float32)
    bv = 0.03 * jnp.ones((1, HIDDEN), jnp.float32)
    bo = 0.04 * jnp.ones((1, HIDDEN), jnp.float32)
    b1 = 0.01 * jnp.ones((1, PF_DIM), jnp.float32)
    b2 = 0.02 * jnp.ones((1, HIDDEN), jnp.float32)
    ln1_g = jnp.ones((1, HIDDEN), jnp.float32)
    ln1_b = jnp.zeros((1, HIDDEN), jnp.float32)
    ln2_g = jnp.ones((1, HIDDEN), jnp.float32)
    ln2_b = jnp.zeros((1, HIDDEN), jnp.float32)
    return (wq, bq, wk, bk, wv, bv, wo, bo, ln1_g, ln1_b,
            w1, b1, w2, b2, ln2_g, ln2_b)


def reference(src, src_mask, params):
    (wq, bq, wk, bk, wv, bv, wo, bo, ln1_g, ln1_b,
     w1, b1, w2, b2, ln2_g, ln2_b) = params
    B, S, H = src.shape

    def ln(x, g, b):
        mu = jnp.mean(x, axis=-1, keepdims=True)
        var = jnp.mean((x - mu) ** 2, axis=-1, keepdims=True)
        return (x - mu) * lax.rsqrt(var + EPS) * g + b

    q = src @ wq + bq
    k = src @ wk + bk
    v = src @ wv + bv
    q = q.reshape(B, S, N_HEADS, HEAD_DIM).transpose(0, 2, 1, 3)
    k = k.reshape(B, S, N_HEADS, HEAD_DIM).transpose(0, 2, 1, 3)
    v = v.reshape(B, S, N_HEADS, HEAD_DIM).transpose(0, 2, 1, 3)
    energy = jnp.einsum("bhqd,bhkd->bhqk", q, k) / jnp.sqrt(jnp.float32(HEAD_DIM))
    energy = jnp.where(src_mask[:, None, None, :] == 0.0, -1e10, energy)
    attn = jax.nn.softmax(energy, axis=-1)
    ctx = jnp.einsum("bhqk,bhkd->bhqd", attn, v).transpose(0, 2, 1, 3).reshape(B, S, H)
    attn_out = ctx @ wo + bo
    y1 = ln(src + attn_out, ln1_g, ln1_b)
    ff = jnp.maximum(y1 @ w1 + b1, 0.0) @ w2 + b2
    return ln(y1 + ff, ln2_g, ln2_b)


if __name__ == "__main__":
    key = jax.random.PRNGKey(0)
    k_src, k_par = jax.random.split(key)
    src = jax.random.normal(k_src, (BATCH, SEQ, HIDDEN), jnp.float32)
    # mask: last two key positions of batch 1 are padding
    src_mask = jnp.ones((BATCH, SEQ), jnp.float32).at[1, -2:].set(0.0)
    params = make_params(k_par)
    w_all, w1b = pack_params(params)      # one-time packing (not per call)

    out = encoder_layer(src, src_mask, w_all, w1b)
    out = jax.block_until_ready(out)

    ref = reference(src, src_mask, params)
    assert out.shape == (BATCH, SEQ, HIDDEN)
    # Softmax is now exact (no approx reciprocal); remaining slack only covers
    # possible f32-matmul pass differences between the XLA reference dots and
    # the in-kernel MXU path.
    max_err = float(jnp.max(jnp.abs(out - ref)))
    assert jnp.allclose(out, ref, atol=2e-3, rtol=2e-3), max_err
    print("KERNEL_OK")
</pallas_src>

<mosaic_0001>
module attributes {stable_mosaic.version = 11 : i64} {
  func.func @encoder_layer_kernel(%arg0: i32, %arg1: memref<16x32xf32, #tpu.memory_space<vmem>>, %arg2: memref<201x32xf32, #tpu.memory_space<vmem>>, %arg3: memref<33x64xf32, #tpu.memory_space<vmem>>, %arg4: memref<2x8xf32, #tpu.memory_space<vmem>>, %arg5: memref<16x32xf32, #tpu.memory_space<vmem>>) attributes {dimension_semantics = [#tpu.dimension_semantics<arbitrary>], iteration_bounds = array<i64: 1>, scalar_prefetch = 0 : i64, scratch_operands = 0 : i64, tpu.core_type = #tpu.core_type<tc>, window_params = [{pipeline_mode = #tpu.pipeline_mode<synchronous>, transform_indices = @transform_0, window_bounds = array<i64: 16, 32>}, {pipeline_mode = #tpu.pipeline_mode<synchronous>, transform_indices = @transform_1, window_bounds = array<i64: 201, 32>}, {pipeline_mode = #tpu.pipeline_mode<synchronous>, transform_indices = @transform_2, window_bounds = array<i64: 33, 64>}, {pipeline_mode = #tpu.pipeline_mode<synchronous>, transform_indices = @transform_3, window_bounds = array<i64: 2, 8>}, {pipeline_mode = #tpu.pipeline_mode<synchronous>, transform_indices = @transform_4, window_bounds = array<i64: 16, 32>}]} {
    %c0 = arith.constant 0 : index
    %c0_0 = arith.constant 0 : index
    %0 = vector.load %arg1[%c0, %c0_0] : memref<16x32xf32, #tpu.memory_space<vmem>>, vector<16x32xf32>
    %c192 = arith.constant 192 : index
    %c0_1 = arith.constant 0 : index
    %1 = vector.load %arg2[%c192, %c0_1] : memref<201x32xf32, #tpu.memory_space<vmem>>, vector<9x32xf32>
    %2 = vector.extract_strided_slice %1 {offsets = [0, 0], sizes = [1, 32], strides = [1, 1]} : vector<9x32xf32> to vector<1x32xf32>
    %3 = vector.extract_strided_slice %1 {offsets = [1, 0], sizes = [1, 32], strides = [1, 1]} : vector<9x32xf32> to vector<1x32xf32>
    %4 = vector.extract_strided_slice %1 {offsets = [2, 0], sizes = [1, 32], strides = [1, 1]} : vector<9x32xf32> to vector<1x32xf32>
    %5 = vector.extract_strided_slice %1 {offsets = [3, 0], sizes = [1, 32], strides = [1, 1]} : vector<9x32xf32> to vector<1x32xf32>
    %6 = vector.extract_strided_slice %1 {offsets = [4, 0], sizes = [1, 32], strides = [1, 1]} : vector<9x32xf32> to vector<1x32xf32>
    %7 = vector.extract_strided_slice %1 {offsets = [5, 0], sizes = [1, 32], strides = [1, 1]} : vector<9x32xf32> to vector<1x32xf32>
    %8 = vector.extract_strided_slice %1 {offsets = [6, 0], sizes = [1, 32], strides = [1, 1]} : vector<9x32xf32> to vector<1x32xf32>
    %9 = vector.extract_strided_slice %1 {offsets = [7, 0], sizes = [1, 32], strides = [1, 1]} : vector<9x32xf32> to vector<1x32xf32>
    %10 = vector.extract_strided_slice %1 {offsets = [8, 0], sizes = [1, 32], strides = [1, 1]} : vector<9x32xf32> to vector<1x32xf32>
    %c0_2 = arith.constant 0 : index
    %c0_3 = arith.constant 0 : index
    %11 = vector.load %arg2[%c0_2, %c0_3] : memref<201x32xf32, #tpu.memory_space<vmem>>, vector<32x32xf32>
    %cst = arith.constant dense<0.000000e+00> : vector<16x32xf32>
    %12 = tpu.matmul %0, %11, %cst {dimension_numbers = #tpu.dot_dimension_numbers<[1], [0], [0], [1], [0, 0, 1, 1], [], []>} : vector<16x32xf32>, vector<32x32xf32>, vector<16x32xf32> -> vector<16x32xf32>
    %13 = vector.broadcast %2 : vector<1x32xf32> to vector<16x32xf32>
    %14 = arith.addf %12, %13 : vector<16x32xf32>
    %c32 = arith.constant 32 : index
    %c0_4 = arith.constant 0 : index
    %15 = vector.load %arg2[%c32, %c0_4] : memref<201x32xf32, #tpu.memory_space<vmem>>, vector<32x32xf32>
    %cst_5 = arith.constant dense<0.000000e+00> : vector<16x32xf32>
    %16 = tpu.matmul %0, %15, %cst_5 {dimension_numbers = #tpu.dot_dimension_numbers<[1], [0], [0], [1], [0, 0, 1, 1], [], []>} : vector<16x32xf32>, vector<32x32xf32>, vector<16x32xf32> -> vector<16x32xf32>
    %17 = vector.broadcast %3 : vector<1x32xf32> to vector<16x32xf32>
    %18 = arith.addf %16, %17 : vector<16x32xf32>
    %c64 = arith.constant 64 : index
    %c0_6 = arith.constant 0 : index
    %19 = vector.load %arg2[%c64, %c0_6] : memref<201x32xf32, #tpu.memory_space<vmem>>, vector<32x32xf32>
    %cst_7 = arith.constant dense<0.000000e+00> : vector<16x32xf32>
    %20 = tpu.matmul %0, %19, %cst_7 {dimension_numbers = #tpu.dot_dimension_numbers<[1], [0], [0], [1], [0, 0, 1, 1], [], []>} : vector<16x32xf32>, vector<32x32xf32>, vector<16x32xf32> -> vector<16x32xf32>
    %21 = vector.broadcast %4 : vector<1x32xf32> to vector<16x32xf32>
    %22 = arith.addf %20, %21 : vector<16x32xf32>
    %23 = vector.shape_cast %14 : vector<16x32xf32> to vector<2x8x32xf32>
    %24 = vector.extract_strided_slice %23 {offsets = [0, 0, 0], sizes = [2, 8, 8], strides = [1, 1, 1]} : vector<2x8x32xf32> to vector<2x8x8xf32>
    %25 = vector.extract_strided_slice %23 {offsets = [0, 0, 8], sizes = [2, 8, 8], strides = [1, 1, 1]} : vector<2x8x32xf32> to vector<2x8x8xf32>
    %26 = vector.extract_strided_slice %23 {offsets = [0, 0, 16], sizes = [2, 8, 8], strides = [1, 1, 1]} : vector<2x8x32xf32> to vector<2x8x8xf32>
    %27 = vector.extract_strided_slice %23 {offsets = [0, 0, 24], sizes = [2, 8, 8], strides = [1, 1, 1]} : vector<2x8x32xf32> to vector<2x8x8xf32>
    %28 = tpu.concatenate %24, %25, %26, %27 in 0 : vector<2x8x8xf32>, vector<2x8x8xf32>, vector<2x8x8xf32>, vector<2x8x8xf32> -> vector<8x8x8xf32>
    %29 = vector.shape_cast %18 : vector<16x32xf32> to vector<2x8x32xf32>
    %30 = vector.extract_strided_slice %29 {offsets = [0, 0, 0], sizes = [2, 8, 8], strides = [1, 1, 1]} : vector<2x8x32xf32> to vector<2x8x8xf32>
    %31 = vector.extract_strided_slice %29 {offsets = [0, 0, 8], sizes = [2, 8, 8], strides = [1, 1, 1]} : vector<2x8x32xf32> to vector<2x8x8xf32>
    %32 = vector.extract_strided_slice %29 {offsets = [0, 0, 16], sizes = [2, 8, 8], strides = [1, 1, 1]} : vector<2x8x32xf32> to vector<2x8x8xf32>
    %33 = vector.extract_strided_slice %29 {offsets = [0, 0, 24], sizes = [2, 8, 8], strides = [1, 1, 1]} : vector<2x8x32xf32> to vector<2x8x8xf32>
    %34 = tpu.concatenate %30, %31, %32, %33 in 0 : vector<2x8x8xf32>, vector<2x8x8xf32>, vector<2x8x8xf32>, vector<2x8x8xf32> -> vector<8x8x8xf32>
    %35 = vector.shape_cast %22 : vector<16x32xf32> to vector<2x8x32xf32>
    %36 = vector.extract_strided_slice %35 {offsets = [0, 0, 0], sizes = [2, 8, 8], strides = [1, 1, 1]} : vector<2x8x32xf32> to vector<2x8x8xf32>
    %37 = vector.extract_strided_slice %35 {offsets = [0, 0, 8], sizes = [2, 8, 8], strides = [1, 1, 1]} : vector<2x8x32xf32> to vector<2x8x8xf32>
    %38 = vector.extract_strided_slice %35 {offsets = [0, 0, 16], sizes = [2, 8, 8], strides = [1, 1, 1]} : vector<2x8x32xf32> to vector<2x8x8xf32>
    %39 = vector.extract_strided_slice %35 {offsets = [0, 0, 24], sizes = [2, 8, 8], strides = [1, 1, 1]} : vector<2x8x32xf32> to vector<2x8x8xf32>
    %40 = tpu.concatenate %36, %37, %38, %39 in 0 : vector<2x8x8xf32>, vector<2x8x8xf32>, vector<2x8x8xf32>, vector<2x8x8xf32> -> vector<8x8x8xf32>
    "tpu.trace_start"() <{level = 10 : i32, message = "bqd,bkd->bqk"}> : () -> ()
    %cst_8 = arith.constant dense<0.000000e+00> : vector<8x8x8xf32>
    %41 = tpu.matmul %28, %34, %cst_8 {dimension_numbers = #tpu.dot_dimension_numbers<[2], [2], [1], [1], [0, 0, 0, 1, 1, 1], [0], [0]>} : vector<8x8x8xf32>, vector<8x8x8xf32>, vector<8x8x8xf32> -> vector<8x8x8xf32>
    "tpu.trace_stop"() : () -> ()
    %c0_9 = arith.constant 0 : index
    %c0_10 = arith.constant 0 : index
    %42 = vector.load %arg4[%c0_9, %c0_10] : memref<2x8xf32, #tpu.memory_space<vmem>>, vector<2x8xf32>
    %43 = vector.extract_strided_slice %42 {offsets = [0, 0], sizes = [1, 8], strides = [1, 1]} : vector<2x8xf32> to vector<1x8xf32>
    %44 = vector.shape_cast %43 : vector<1x8xf32> to vector<1x1x8xf32>
    %45 = vector.extract_strided_slice %42 {offsets = [1, 0], sizes = [1, 8], strides = [1, 1]} : vector<2x8xf32> to vector<1x8xf32>
    %46 = vector.shape_cast %45 : vector<1x8xf32> to vector<1x1x8xf32>
    %47 = tpu.concatenate %44, %46, %44, %46, %44, %46, %44, %46 in 0 : vector<1x1x8xf32>, vector<1x1x8xf32>, vector<1x1x8xf32>, vector<1x1x8xf32>, vector<1x1x8xf32>, vector<1x1x8xf32>, vector<1x1x8xf32>, vector<1x1x8xf32> -> vector<8x1x8xf32>
    %48 = vector.broadcast %47 : vector<8x1x8xf32> to vector<8x8x8xf32>
    %49 = arith.addf %41, %48 : vector<8x8x8xf32>
    %cst_11 = arith.constant dense<0xFF800000> : vector<8x8xf32>
    %50 = vector.multi_reduction <maximumf>, %49, %cst_11 [2] : vector<8x8x8xf32> to vector<8x8xf32>
    %51 = vector.shape_cast %50 : vector<8x8xf32> to vector<8x8x1xf32>
    %52 = vector.broadcast %51 : vector<8x8x1xf32> to vector<8x8x8xf32>
    %53 = arith.subf %49, %52 : vector<8x8x8xf32>
    %54 = math.exp %53 : vector<8x8x8xf32>
    %cst_12 = arith.constant dense<0.000000e+00> : vector<8x8xf32>
    %55 = vector.multi_reduction <add>, %54, %cst_12 [2] : vector<8x8x8xf32> to vector<8x8xf32>
    %56 = vector.shape_cast %55 : vector<8x8xf32> to vector<8x8x1xf32>
    %57 = vector.broadcast %56 : vector<8x8x1xf32> to vector<8x8x8xf32>
    %58 = arith.divf %54, %57 : vector<8x8x8xf32>
    "tpu.trace_start"() <{level = 10 : i32, message = "bqk,bkd->bqd"}> : () -> ()
    %cst_13 = arith.constant dense<0.000000e+00> : vector<8x8x8xf32>
    %59 = tpu.matmul %58, %40, %cst_13 {dimension_numbers = #tpu.dot_dimension_numbers<[2], [1], [1], [2], [0, 0, 0, 1, 1, 2], [0], [0]>} : vector<8x8x8xf32>, vector<8x8x8xf32>, vector<8x8x8xf32> -> vector<8x8x8xf32>
    "tpu.trace_stop"() : () -> ()
    %60 = vector.extract_strided_slice %59 {offsets = [0, 0, 0], sizes = [2, 8, 8], strides = [1, 1, 1]} : vector<8x8x8xf32> to vector<2x8x8xf32>
    %61 = vector.extract_strided_slice %59 {offsets = [2, 0, 0], sizes = [2, 8, 8], strides = [1, 1, 1]} : vector<8x8x8xf32> to vector<2x8x8xf32>
    %62 = vector.extract_strided_slice %59 {offsets = [4, 0, 0], sizes = [2, 8, 8], strides = [1, 1, 1]} : vector<8x8x8xf32> to vector<2x8x8xf32>
    %63 = vector.extract_strided_slice %59 {offsets = [6, 0, 0], sizes = [2, 8, 8], strides = [1, 1, 1]} : vector<8x8x8xf32> to vector<2x8x8xf32>
    %64 = tpu.concatenate %60, %61, %62, %63 in 2 : vector<2x8x8xf32>, vector<2x8x8xf32>, vector<2x8x8xf32>, vector<2x8x8xf32> -> vector<2x8x32xf32>
    %65 = vector.shape_cast %64 : vector<2x8x32xf32> to vector<16x32xf32>
    %c96 = arith.constant 96 : index
    %c0_14 = arith.constant 0 : index
    %66 = vector.load %arg2[%c96, %c0_14] : memref<201x32xf32, #tpu.memory_space<vmem>>, vector<32x32xf32>
    %cst_15 = arith.constant dense<0.000000e+00> : vector<16x32xf32>
    %67 = tpu.matmul %65, %66, %cst_15 {dimension_numbers = #tpu.dot_dimension_numbers<[1], [0], [0], [1], [0, 0, 1, 1], [], []>} : vector<16x32xf32>, vector<32x32xf32>, vector<16x32xf32> -> vector<16x32xf32>
    %68 = vector.broadcast %5 : vector<1x32xf32> to vector<16x32xf32>
    %69 = arith.addf %67, %68 : vector<16x32xf32>
    %70 = arith.addf %0, %69 : vector<16x32xf32>
    %cst_16 = arith.constant dense<0.000000e+00> : vector<16xf32>
    %71 = vector.multi_reduction <add>, %70, %cst_16 [1] : vector<16x32xf32> to vector<16xf32>
    %72 = vector.shape_cast %71 : vector<16xf32> to vector<16x1xf32>
    %cst_17 = arith.constant 3.200000e+01 : f32
    %73 = vector.broadcast %cst_17 : f32 to vector<16x1xf32>
    %74 = arith.divf %72, %73 : vector<16x1xf32>
    %75 = vector.broadcast %74 : vector<16x1xf32> to vector<16x32xf32>
    %76 = arith.subf %70, %75 : vector<16x32xf32>
    %77 = arith.mulf %76, %76 : vector<16x32xf32>
    %cst_18 = arith.constant dense<0.000000e+00> : vector<16xf32>
    %78 = vector.multi_reduction <add>, %77, %cst_18 [1] : vector<16x32xf32> to vector<16xf32>
    %79 = vector.shape_cast %78 : vector<16xf32> to vector<16x1xf32>
    %cst_19 = arith.constant 3.200000e+01 : f32
    %80 = vector.broadcast %cst_19 : f32 to vector<16x1xf32>
    %81 = arith.divf %79, %80 : vector<16x1xf32>
    %82 = vector.broadcast %74 : vector<16x1xf32> to vector<16x32xf32>
    %83 = arith.subf %70, %82 : vector<16x32xf32>
    %cst_20 = arith.constant 9.99999974E-6 : f32
    %84 = vector.broadcast %cst_20 : f32 to vector<16x1xf32>
    %85 = arith.addf %81, %84 : vector<16x1xf32>
    %86 = math.rsqrt %85 : vector<16x1xf32>
    %87 = vector.broadcast %86 : vector<16x1xf32> to vector<16x32xf32>
    %88 = arith.mulf %83, %87 : vector<16x32xf32>
    %89 = vector.broadcast %6 : vector<1x32xf32> to vector<16x32xf32>
    %90 = arith.mulf %88, %89 : vector<16x32xf32>
    %91 = vector.broadcast %7 : vector<1x32xf32> to vector<16x32xf32>
    %92 = arith.addf %90, %91 : vector<16x32xf32>
    %c0_21 = arith.constant 0 : index
    %c0_22 = arith.constant 0 : index
    %93 = vector.load %arg3[%c0_21, %c0_22] : memref<33x64xf32, #tpu.memory_space<vmem>>, vector<32x64xf32>
    %c32_23 = arith.constant 32 : index
    %c0_24 = arith.constant 0 : index
    %94 = vector.load %arg3[%c32_23, %c0_24] : memref<33x64xf32, #tpu.memory_space<vmem>>, vector<1x64xf32>
    %cst_25 = arith.constant dense<0.000000e+00> : vector<16x64xf32>
    %95 = tpu.matmul %92, %93, %cst_25 {dimension_numbers = #tpu.dot_dimension_numbers<[1], [0], [0], [1], [0, 0, 1, 1], [], []>} : vector<16x32xf32>, vector<32x64xf32>, vector<16x64xf32> -> vector<16x64xf32>
    %96 = vector.broadcast %94 : vector<1x64xf32> to vector<16x64xf32>
    %97 = arith.addf %95, %96 : vector<16x64xf32>
    %cst_26 = arith.constant 0.000000e+00 : f32
    %98 = vector.broadcast %cst_26 : f32 to vector<16x64xf32>
    %99 = arith.maximumf %97, %98 : vector<16x64xf32>
    %c128 = arith.constant 128 : index
    %c0_27 = arith.constant 0 : index
    %100 = vector.load %arg2[%c128, %c0_27] : memref<201x32xf32, #tpu.memory_space<vmem>>, vector<64x32xf32>
    %cst_28 = arith.constant dense<0.000000e+00> : vector<16x32xf32>
    %101 = tpu.matmul %99, %100, %cst_28 {dimension_numbers = #tpu.dot_dimension_numbers<[1], [0], [0], [1], [0, 0, 1, 1], [], []>} : vector<16x64xf32>, vector<64x32xf32>, vector<16x32xf32> -> vector<16x32xf32>
    %102 = vector.broadcast %8 : vector<1x32xf32> to vector<16x32xf32>
    %103 = arith.addf %101, %102 : vector<16x32xf32>
    %104 = arith.addf %92, %103 : vector<16x32xf32>
    %cst_29 = arith.constant dense<0.000000e+00> : vector<16xf32>
    %105 = vector.multi_reduction <add>, %104, %cst_29 [1] : vector<16x32xf32> to vector<16xf32>
    %106 = vector.shape_cast %105 : vector<16xf32> to vector<16x1xf32>
    %cst_30 = arith.constant 3.200000e+01 : f32
    %107 = vector.broadcast %cst_30 : f32 to vector<16x1xf32>
    %108 = arith.divf %106, %107 : vector<16x1xf32>
    %109 = vector.broadcast %108 : vector<16x1xf32> to vector<16x32xf32>
    %110 = arith.subf %104, %109 : vector<16x32xf32>
    %111 = arith.mulf %110, %110 : vector<16x32xf32>
    %cst_31 = arith.constant dense<0.000000e+00> : vector<16xf32>
    %112 = vector.multi_reduction <add>, %111, %cst_31 [1] : vector<16x32xf32> to vector<16xf32>
    %113 = vector.shape_cast %112 : vector<16xf32> to vector<16x1xf32>
    %cst_32 = arith.constant 3.200000e+01 : f32
    %114 = vector.broadcast %cst_32 : f32 to vector<16x1xf32>
    %115 = arith.divf %113, %114 : vector<16x1xf32>
    %116 = vector.broadcast %108 : vector<16x1xf32> to vector<16x32xf32>
    %117 = arith.subf %104, %116 : vector<16x32xf32>
    %cst_33 = arith.constant 9.99999974E-6 : f32
    %118 = vector.broadcast %cst_33 : f32 to vector<16x1xf32>
    %119 = arith.addf %115, %118 : vector<16x1xf32>
    %120 = math.rsqrt %119 : vector<16x1xf32>
    %121 = vector.broadcast %120 : vector<16x1xf32> to vector<16x32xf32>
    %122 = arith.mulf %117, %121 : vector<16x32xf32>
    %123 = vector.broadcast %9 : vector<1x32xf32> to vector<16x32xf32>
    %124 = arith.mulf %122, %123 : vector<16x32xf32>
    %125 = vector.broadcast %10 : vector<1x32xf32> to vector<16x32xf32>
    %126 = arith.addf %124, %125 : vector<16x32xf32>
    %c0_34 = arith.constant 0 : index
    %c0_35 = arith.constant 0 : index
    %127 = vector.load %arg5[%c0_34, %c0_35] : memref<16x32xf32, #tpu.memory_space<vmem>>, vector<16x32xf32>
    tpu.vector_store %arg5[%c0_34, %c0_35], %126 {strides = array<i32>} : memref<16x32xf32, #tpu.memory_space<vmem>>, vector<16x32xf32>,
    return
  }
  func.func @transform_0(%arg0: i32) -> (i32, i32) {
    %c0_i32 = arith.constant 0 : i32
    %c0_i32_0 = arith.constant 0 : i32
    %c0_i32_1 = arith.constant 0 : i32
    return %c0_i32, %c0_i32_0 : i32, i32
  }
  func.func @transform_1(%arg0: i32) -> (i32, i32) {
    %c0_i32 = arith.constant 0 : i32
    %c0_i32_0 = arith.constant 0 : i32
    %c0_i32_1 = arith.constant 0 : i32
    return %c0_i32, %c0_i32_0 : i32, i32
  }
  func.func @transform_2(%arg0: i32) -> (i32, i32) {
    %c0_i32 = arith.constant 0 : i32
    %c0_i32_0 = arith.constant 0 : i32
    %c0_i32_1 = arith.constant 0 : i32
    return %c0_i32, %c0_i32_0 : i32, i32
  }
  func.func @transform_3(%arg0: i32) -> (i32, i32) {
    %c0_i32 = arith.constant 0 : i32
    %c0_i32_0 = arith.constant 0 : i32
    %c0_i32_1 = arith.constant 0 : i32
    return %c0_i32, %c0_i32_0 : i32, i32
  }
  func.func @transform_4(%arg0: i32) -> (i32, i32) {
    %c0_i32 = arith.constant 0 : i32
    %c0_i32_0 = arith.constant 0 : i32
    %c0_i32_1 = arith.constant 0 : i32
    return %c0_i32, %c0_i32_0 : i32, i32
  }
}

</mosaic_0001>

<llo_original>
// kernel: encoder_layer.1
$region0: #{encoder_layer.1}
  #allocation0 [shape = 'u32[]', space=smem, size = 0x4, offset = 0x4, fixed_abs, tag = 'smem constant byte address 0x4 - core index']
  #allocation1 [shape = 'u32[144,128]{1,0:T(1,128)}', space=vmem, size = 0x12000, scoped, tag = 'internal scratch']
  %s0 = inlined_call_operand.vmem [shape: f32[16,32], index: 0, kind: input, shape index: {}]
  %s1 = inlined_call_operand.vmem [shape: f32[201,32], index: 1, kind: input, shape index: {}]
  %s2 = inlined_call_operand.vmem [shape: f32[33,64], index: 2, kind: input, shape index: {}]
  %s3 = inlined_call_operand.vmem [shape: f32[2,8], index: 3, kind: input, shape index: {}]
  %s4 = inlined_call_operand.hbm [shape: f32[16,32], index: 4, kind: output, shape index: {}]
  %s5 = sld [smem:[#allocation0]]
  $region26: #{encoder_layer.1} parent=0
    _
  %s7 = ssub.s32 1, %s5
  %s8 = scalar_select 0, %s7, %s5
  $region1: #{encoder_layer.1} parent=0
    #allocation2 [shape = 'u8[8192]{0}', space=vmem, size = 0x2000, scoped, tag = 'output window, operand 0, single buffered']
    #allocation3 [shape = 's32[1]{0}', space=sflag, size = 0x4, scoped, tag = 'scoped memory for encoder_layer.1']
    %9 = vsyncpa [#allocation3], 0
    // Predicated region
    $region2: #{encoder_layer.1} parent=1 // pred_check
      _
    $region3: #{encoder_layer.1} parent=1 // pred_check_branch
      %11 = sbr.rel (0) target = $region5
    $region4: #{encoder_layer.1} parent=1 // pred_region
      _
    $region5: #{encoder_layer.1} parent=1 // pred_fallthru
      _
    // Predicated region
    $region6: #{encoder_layer.1} parent=1 // pred_check
      _
    $region7: #{encoder_layer.1} parent=1 // pred_check_branch
      %13 = sbr.rel (0) target = $region9
    $region8: #{encoder_layer.1} parent=1 // pred_region
      _
    $region9: #{encoder_layer.1} parent=1 // pred_fallthru
      _
    // Predicated region
    $region10: #{encoder_layer.1} parent=1 // pred_check
      _
    $region11: #{encoder_layer.1} parent=1 // pred_check_branch
      %15 = sbr.rel (0) target = $region13
    $region12: #{encoder_layer.1} parent=1 // pred_region
      _
    $region13: #{encoder_layer.1} parent=1 // pred_fallthru
      _
    // Predicated region
    $region14: #{encoder_layer.1} parent=1 // pred_check
      _
    $region15: #{encoder_layer.1} parent=1 // pred_check_branch
      %17 = sbr.rel (0) target = $region17
    $region16: #{encoder_layer.1} parent=1 // pred_region
      _
    $region17: #{encoder_layer.1} parent=1 // pred_fallthru
      _
    %v18 = vld [vmem:[%s0] sm:$0xff]
    %v19 = vld [vmem:[%s0 + $0x8] sm:$0xff]
    %v20 = vld [vmem:[%s1 + $0xc0] sm:$0xff]
    %v21 = vld [vmem:[%s1 + $0xc8] sm:$0x1]
    %v22 = vld [vmem:[%s1] sm:$0xff]
    %v23 = vld [vmem:[%s1 + $0x8] sm:$0xff]
    %v24 = vld [vmem:[%s1 + $0x10] sm:$0xff]
    %v25 = vld [vmem:[%s1 + $0x18] sm:$0xff]
    %v26 = vlaneseq
    %v27 = vshrl.u32 %v26, 7
    %v28 = vsub.s32 0, %v27
    %v29 = vrot.slane %v20, %v28
    %vm30 = vcmask 261120
    %v32 = vsel %vm30, %v18, 0
    %v35 = vsel %vm30, %v19, 0
    %37 = vmatprep.subr.mxu0 0.0
    %38 = vmatpush1.msra.mxu0 %v22
    %39 = vmatprep.subr.mxu0 0.0
    %40 = vmatpush1.msra.mxu0 %v23
    %41 = vmatprep.subr.mxu0 0.0
    %42 = vmatpush1.msra.mxu0 %v24
    %43 = vmatprep.subr.mxu0 0.0
    %44 = vmatpush1.msra.mxu0 %v25
    %45 = vmatprep.subr.mxu0 0.0
    %46 = vmatpush1.msra.mxu0 0.0
    %47 = vmatprep.subr.mxu0 0.0
    %48 = vmatpush1.msra.mxu0 0.0
    %49 = vmatprep.subr.mxu0 0.0
    %50 = vmatpush1.msra.mxu0 0.0
    %51 = vmatprep.subr.mxu0 0.0
    %52 = vmatpush1.msra.mxu0 0.0
    %53 = vmatprep.subr.mxu0 0.0
    %54 = vmatpush1.msra.mxu0 0.0
    %55 = vmatprep.subr.mxu0 0.0
    %56 = vmatpush1.msra.mxu0 0.0
    %57 = vmatprep.subr.mxu0 0.0
    %58 = vmatpush1.msra.mxu0 0.0
    %59 = vmatprep.subr.mxu0 0.0
    %60 = vmatpush1.msra.mxu0 0.0
    %61 = vmatprep.subr.mxu0 0.0
    %62 = vmatpush1.msra.mxu0 0.0
    %63 = vmatprep.subr.mxu0 0.0
    %64 = vmatpush1.msra.mxu0 0.0
    %65 = vmatprep.subr.mxu0 0.0
    %66 = vmatpush1.msra.mxu0 0.0
    %67 = vmatprep.subr.mxu0 0.0
    %68 = vmatpush1.msra.mxu0 0.0
    %69 = vmatprep.subr.mxu0 0.0
    %70 = vmatpush1.msra.mxu0 0.0
    %71 = vmatprep.subr.mxu0 0.0
    %72 = vmatpush1.msra.mxu0 0.0
    %73 = vmatprep.subr.mxu0 0.0
    %74 = vmatpush1.msra.mxu0 0.0
    %75 = vmatprep.subr.mxu0 0.0
    %76 = vmatpush1.msra.mxu0 0.0
    %77 = vmatprep.subr.mxu0 0.0
    %78 = vmatpush1.msra.mxu0 0.0
    %79 = vmatprep.subr.mxu0 0.0
    %80 = vmatpush1.msra.mxu0 0.0
    %81 = vmatprep.subr.mxu0 0.0
    %82 = vmatpush1.msra.mxu0 0.0
    %83 = vmatprep.subr.mxu0 0.0
    %84 = vmatpush1.msra.mxu0 0.0
    %85 = vmatprep.subr.mxu0 0.0
    %86 = vmatpush1.msra.mxu0 0.0
    %87 = vmatprep.subr.mxu0 0.0
    %88 = vmatpush1.msra.mxu0 0.0
    %89 = vmatprep.subr.mxu0 0.0
    %90 = vmatpush1.msra.mxu0 0.0
    %91 = vmatprep.subr.mxu0 0.0
    %92 = vmatpush1.msra.mxu0 0.0
    %93 = vmatprep.subr.mxu0 0.0
    %94 = vmatpush1.msra.mxu0 0.0
    %95 = vmatprep.subr.mxu0 0.0
    %96 = vmatpush1.msra.mxu0 0.0
    %97 = vmatprep.subr.mxu0 0.0
    %98 = vmatpush1.msra.mxu0 0.0
    %99 = vmatprep.subr.mxu0 0.0
    %100 = vmatpush1.msra.mxu0 0.0
    %101 = vmatprep.mubr.f32.mxu0 0.0
    %102 = vmatmul.mubr.f32.gmra.mrb[0].mxu0 %v32
    %v103 = vpop.f32.mrb[0].mxu0
    %v104 = vadd.f32 %v29, %v103
    %v105 = vpop.f32.mrb[0].mxu0
    %106 = vmatprep.mubr.f32.mxu0 0.0
    %107 = vmatmul.mubr.f32.gmra.mrb[0].mxu0 %v35
    %v108 = vpop.f32.mrb[0].mxu0
    %v109 = vadd.f32 %v29, %v108
    %v110 = vpop.f32.mrb[0].mxu0
    %111 = vdwg.mxu0
    %v112 = vld [vmem:[%s1 + $0x20] sm:$0xff]
    %v113 = vld [vmem:[%s1 + $0x28] sm:$0xff]
    %v114 = vld [vmem:[%s1 + $0x30] sm:$0xff]
    %v115 = vld [vmem:[%s1 + $0x38] sm:$0xff]
    %v116 = vlaneseq
    %v117 = vshrl.u32 %v116, 7
    %v118 = vsub.s32 1, %v117
    %v119 = vrot.slane %v20, %v118
    %120 = vmatprep.subr.mxu0 0.0
    %121 = vmatpush1.msra.mxu0 %v112
    %122 = vmatprep.subr.mxu0 0.0
    %123 = vmatpush1.msra.mxu0 %v113
    %124 = vmatprep.subr.mxu0 0.0
    %125 = vmatpush1.msra.mxu0 %v114
    %126 = vmatprep.subr.mxu0 0.0
    %127 = vmatpush1.msra.mxu0 %v115
    %128 = vmatprep.subr.mxu0 0.0
    %129 = vmatpush1.msra.mxu0 0.0
    %130 = vmatprep.subr.mxu0 0.0
    %131 = vmatpush1.msra.mxu0 0.0
    %132 = vmatprep.subr.mxu0 0.0
    %133 = vmatpush1.msra.mxu0 0.0
    %134 = vmatprep.subr.mxu0 0.0
    %135 = vmatpush1.msra.mxu0 0.0
    %136 = vmatprep.subr.mxu0 0.0
    %137 = vmatpush1.msra.mxu0 0.0
    %138 = vmatprep.subr.mxu0 0.0
    %139 = vmatpush1.msra.mxu0 0.0
    %140 = vmatprep.subr.mxu0 0.0
    %141 = vmatpush1.msra.mxu0 0.0
    %142 = vmatprep.subr.mxu0 0.0
    %143 = vmatpush1.msra.mxu0 0.0
    %144 = vmatprep.subr.mxu0 0.0
    %145 = vmatpush1.msra.mxu0 0.0
    %146 = vmatprep.subr.mxu0 0.0
    %147 = vmatpush1.msra.mxu0 0.0
    %148 = vmatprep.subr.mxu0 0.0
    %149 = vmatpush1.msra.mxu0 0.0
    %150 = vmatprep.subr.mxu0 0.0
    %151 = vmatpush1.msra.mxu0 0.0
    %152 = vmatprep.subr.mxu0 0.0
    %153 = vmatpush1.msra.mxu0 0.0
    %154 = vmatprep.subr.mxu0 0.0
    %155 = vmatpush1.msra.mxu0 0.0
    %156 = vmatprep.subr.mxu0 0.0
    %157 = vmatpush1.msra.mxu0 0.0
    %158 = vmatprep.subr.mxu0 0.0
    %159 = vmatpush1.msra.mxu0 0.0
    %160 = vmatprep.subr.mxu0 0.0
    %161 = vmatpush1.msra.mxu0 0.0
    %162 = vmatprep.subr.mxu0 0.0
    %163 = vmatpush1.msra.mxu0 0.0
    %164 = vmatprep.subr.mxu0 0.0
    %165 = vmatpush1.msra.mxu0 0.0
    %166 = vmatprep.subr.mxu0 0.0
    %167 = vmatpush1.msra.mxu0 0.0
    %168 = vmatprep.subr.mxu0 0.0
    %169 = vmatpush1.msra.mxu0 0.0
    %170 = vmatprep.subr.mxu0 0.0
    %171 = vmatpush1.msra.mxu0 0.0
    %172 = vmatprep.subr.mxu0 0.0
    %173 = vmatpush1.msra.mxu0 0.0
    %174 = vmatprep.subr.mxu0 0.0
    %175 = vmatpush1.msra.mxu0 0.0
    %176 = vmatprep.subr.mxu0 0.0
    %177 = vmatpush1.msra.mxu0 0.0
    %178 = vmatprep.subr.mxu0 0.0
    %179 = vmatpush1.msra.mxu0 0.0
    %180 = vmatprep.subr.mxu0 0.0
    %181 = vmatpush1.msra.mxu0 0.0
    %182 = vmatprep.subr.mxu0 0.0
    %183 = vmatpush1.msra.mxu0 0.0
    %184 = vmatprep.mubr.f32.mxu0 0.0
    %185 = vmatmul.mubr.f32.gmra.mrb[0].mxu0 %v32
    %v186 = vpop.f32.mrb[0].mxu0
    %v187 = vadd.f32 %v119, %v186
    %v188 = vpop.f32.mrb[0].mxu0
    %189 = vmatprep.mubr.f32.mxu0 0.0
    %190 = vmatmul.mubr.f32.gmra.mrb[0].mxu0 %v35
    %v191 = vpop.f32.mrb[0].mxu0
    %v192 = vadd.f32 %v119, %v191
    %v193 = vpop.f32.mrb[0].mxu0
    %194 = vdwg.mxu0
    %v195 = vld [vmem:[%s1 + $0x40] sm:$0xff]
    %v196 = vld [vmem:[%s1 + $0x48] sm:$0xff]
    %v197 = vld [vmem:[%s1 + $0x50] sm:$0xff]
    %v198 = vld [vmem:[%s1 + $0x58] sm:$0xff]
    %v199 = vlaneseq
    %v200 = vshrl.u32 %v199, 7
    %v201 = vsub.s32 2, %v200
    %v202 = vrot.slane %v20, %v201
    %203 = vmatprep.subr.mxu0 0.0
    %204 = vmatpush1.msra.mxu0 %v195
    %205 = vmatprep.subr.mxu0 0.0
    %206 = vmatpush1.msra.mxu0 %v196
    %207 = vmatprep.subr.mxu0 0.0
    %208 = vmatpush1.msra.mxu0 %v197
    %209 = vmatprep.subr.mxu0 0.0
    %210 = vmatpush1.msra.mxu0 %v198
    %211 = vmatprep.subr.mxu0 0.0
    %212 = vmatpush1.msra.mxu0 0.0
    %213 = vmatprep.subr.mxu0 0.0
    %214 = vmatpush1.msra.mxu0 0.0
    %215 = vmatprep.subr.mxu0 0.0
    %216 = vmatpush1.msra.mxu0 0.0
    %217 = vmatprep.subr.mxu0 0.0
    %218 = vmatpush1.msra.mxu0 0.0
    %219 = vmatprep.subr.mxu0 0.0
    %220 = vmatpush1.msra.mxu0 0.0
    %221 = vmatprep.subr.mxu0 0.0
    %222 = vmatpush1.msra.mxu0 0.0
    %223 = vmatprep.subr.mxu0 0.0
    %224 = vmatpush1.msra.mxu0 0.0
    %225 = vmatprep.subr.mxu0 0.0
    %226 = vmatpush1.msra.mxu0 0.0
    %227 = vmatprep.subr.mxu0 0.0
    %228 = vmatpush1.msra.mxu0 0.0
    %229 = vmatprep.subr.mxu0 0.0
    %230 = vmatpush1.msra.mxu0 0.0
    %231 = vmatprep.subr.mxu0 0.0
    %232 = vmatpush1.msra.mxu0 0.0
    %233 = vmatprep.subr.mxu0 0.0
    %234 = vmatpush1.msra.mxu0 0.0
    %235 = vmatprep.subr.mxu0 0.0
    %236 = vmatpush1.msra.mxu0 0.0
    %237 = vmatprep.subr.mxu0 0.0
    %238 = vmatpush1.msra.mxu0 0.0
    %239 = vmatprep.subr.mxu0 0.0
    %240 = vmatpush1.msra.mxu0 0.0
    %241 = vmatprep.subr.mxu0 0.0
    %242 = vmatpush1.msra.mxu0 0.0
    %243 = vmatprep.subr.mxu0 0.0
    %244 = vmatpush1.msra.mxu0 0.0
    %245 = vmatprep.subr.mxu0 0.0
    %246 = vmatpush1.msra.mxu0 0.0
    %247 = vmatprep.subr.mxu0 0.0
    %248 = vmatpush1.msra.mxu0 0.0
    %249 = vmatprep.subr.mxu0 0.0
    %250 = vmatpush1.msra.mxu0 0.0
    %251 = vmatprep.subr.mxu0 0.0
    %252 = vmatpush1.msra.mxu0 0.0
    %253 = vmatprep.subr.mxu0 0.0
    %254 = vmatpush1.msra.mxu0 0.0
    %255 = vmatprep.subr.mxu0 0.0
    %256 = vmatpush1.msra.mxu0 0.0
    %257 = vmatprep.subr.mxu0 0.0
    %258 = vmatpush1.msra.mxu0 0.0
    %259 = vmatprep.subr.mxu0 0.0
    %260 = vmatpush1.msra.mxu0 0.0
    %261 = vmatprep.subr.mxu0 0.0
    %262 = vmatpush1.msra.mxu0 0.0
    %263 = vmatprep.subr.mxu0 0.0
    %264 = vmatpush1.msra.mxu0 0.0
    %265 = vmatprep.subr.mxu0 0.0
    %266 = vmatpush1.msra.mxu0 0.0
    %267 = vmatprep.mubr.f32.mxu0 0.0
    %268 = vmatmul.mubr.f32.gmra.mrb[0].mxu0 %v32
    %v269 = vpop.f32.mrb[0].mxu0
    %v270 = vadd.f32 %v202, %v269
    %v271 = vpop.f32.mrb[0].mxu0
    %272 = vmatprep.mubr.f32.mxu0 0.0
    %273 = vmatmul.mubr.f32.gmra.mrb[0].mxu0 %v35
    %v274 = vpop.f32.mrb[0].mxu0
    %v275 = vadd.f32 %v202, %v274
    %v276 = vpop.f32.mrb[0].mxu0
    %277 = vdwg.mxu0
    %280 = vrot.lane.b32.xlu0 %v104, 120
    %v281 = vpop.permute.xlu0 %280
    %282 = vrot.lane.b32.xlu0 %v109, 120
    %v283 = vpop.permute.xlu0 %282
    %284 = vrot.lane.b32.xlu0 %v104, 112
    %v285 = vpop.permute.xlu0 %284
    %286 = vrot.lane.b32.xlu0 %v109, 112
    %v287 = vpop.permute.xlu0 %286
    %288 = vrot.lane.b32.xlu0 %v104, 104
    %v289 = vpop.permute.xlu0 %288
    %290 = vrot.lane.b32.xlu0 %v109, 104
    %v291 = vpop.permute.xlu0 %290
    %294 = vrot.lane.b32.xlu0 %v187, 120
    %v295 = vpop.permute.xlu0 %294
    %296 = vrot.lane.b32.xlu0 %v192, 120
    %v297 = vpop.permute.xlu0 %296
    %298 = vrot.lane.b32.xlu0 %v187, 112
    %v299 = vpop.permute.xlu0 %298
    %300 = vrot.lane.b32.xlu0 %v192, 112
    %v301 = vpop.permute.xlu0 %300
    %302 = vrot.lane.b32.xlu0 %v187, 104
    %v303 = vpop.permute.xlu0 %302
    %304 = vrot.lane.b32.xlu0 %v192, 104
    %v305 = vpop.permute.xlu0 %304
    %308 = vrot.lane.b32.xlu0 %v270, 120
    %v309 = vpop.permute.xlu0 %308
    %310 = vrot.lane.b32.xlu0 %v275, 120
    %v311 = vpop.permute.xlu0 %310
    %314 = vrot.lane.b32.xlu0 %v270, 112
    %v315 = vpop.permute.xlu0 %314
    %316 = vrot.lane.b32.xlu0 %v275, 112
    %v317 = vpop.permute.xlu0 %316
    %320 = vrot.lane.b32.xlu0 %v270, 104
    %v321 = vpop.permute.xlu0 %320
    %322 = vrot.lane.b32.xlu0 %v275, 104
    %v323 = vpop.permute.xlu0 %322
    %v326 = vld [vmem:[%s3] sm:$0x3]
    %v328 = vrot.slane %v326, 1
    %v330 = vlaneseq
    %v331 = vshrl.u32 %v330, 7
    %v332 = vsub.s32 0, %v331
    %v333 = vrot.slane %v326, %v332
    %v334 = vlaneseq
    %v335 = vshrl.u32 %v334, 7
    %v336 = vsub.s32 0, %v335
    %v337 = vrot.slane %v328, %v336
    %vm338 = vcmask 64512
    %v339 = vsel %vm338, %v104, 0
    %v341 = vsel %vm338, %v187, 0
    %343 = vmatprep.subr.mxu0 0.0
    %344 = vmatpush1.xpose.msra.mxu0 %v341
    %345 = vmatprep.subr.mxu0 0.0
    %346 = vmatpush1.xpose.msra.mxu0 0.0
    %347 = vmatprep.subr.mxu0 0.0
    %348 = vmatpush1.xpose.msra.mxu0 0.0
    %349 = vmatprep.subr.mxu0 0.0
    %350 = vmatpush1.xpose.msra.mxu0 0.0
    %351 = vmatprep.subr.mxu0 0.0
    %352 = vmatpush1.xpose.msra.mxu0 0.0
    %353 = vmatprep.subr.mxu0 0.0
    %354 = vmatpush1.xpose.msra.mxu0 0.0
    %355 = vmatprep.subr.mxu0 0.0
    %356 = vmatpush1.xpose.msra.mxu0 0.0
    %357 = vmatprep.subr.mxu0 0.0
    %358 = vmatpush1.xpose.msra.mxu0 0.0
    %359 = vmatprep.subr.mxu0 0.0
    %360 = vmatpush1.xpose.msra.mxu0 0.0
    %361 = vmatprep.subr.mxu0 0.0
    %362 = vmatpush1.xpose.msra.mxu0 0.0
    %363 = vmatprep.subr.mxu0 0.0
    %364 = vmatpush1.xpose.msra.mxu0 0.0
    %365 = vmatprep.subr.mxu0 0.0
    %366 = vmatpush1.xpose.msra.mxu0 0.0
    %367 = vmatprep.subr.mxu0 0.0
    %368 = vmatpush1.xpose.msra.mxu0 0.0
    %369 = vmatprep.subr.mxu0 0.0
    %370 = vmatpush1.xpose.msra.mxu0 0.0
    %371 = vmatprep.subr.mxu0 0.0
    %372 = vmatpush1.xpose.msra.mxu0 0.0
    %373 = vmatprep.subr.mxu0 0.0
    %374 = vmatpush1.xpose.msra.mxu0 0.0
    %375 = vmatprep.subr.mxu0 0.0
    %376 = vmatpush1.xpose.msra.mxu0 0.0
    %377 = vmatprep.subr.mxu0 0.0
    %378 = vmatpush1.xpose.msra.mxu0 0.0
    %379 = vmatprep.subr.mxu0 0.0
    %380 = vmatpush1.xpose.msra.mxu0 0.0
    %381 = vmatprep.subr.mxu0 0.0
    %382 = vmatpush1.xpose.msra.mxu0 0.0
    %383 = vmatprep.subr.mxu0 0.0
    %384 = vmatpush1.xpose.msra.mxu0 0.0
    %385 = vmatprep.subr.mxu0 0.0
    %386 = vmatpush1.xpose.msra.mxu0 0.0
    %387 = vmatprep.subr.mxu0 0.0
    %388 = vmatpush1.xpose.msra.mxu0 0.0
    %389 = vmatprep.subr.mxu0 0.0
    %390 = vmatpush1.xpose.msra.mxu0 0.0
    %391 = vmatprep.subr.mxu0 0.0
    %392 = vmatpush1.xpose.msra.mxu0 0.0
    %393 = vmatprep.subr.mxu0 0.0
    %394 = vmatpush1.xpose.msra.mxu0 0.0
    %395 = vmatprep.subr.mxu0 0.0
    %396 = vmatpush1.xpose.msra.mxu0 0.0
    %397 = vmatprep.subr.mxu0 0.0
    %398 = vmatpush1.xpose.msra.mxu0 0.0
    %399 = vmatprep.subr.mxu0 0.0
    %400 = vmatpush1.xpose.msra.mxu0 0.0
    %401 = vmatprep.subr.mxu0 0.0
    %402 = vmatpush1.xpose.msra.mxu0 0.0
    %403 = vmatprep.subr.mxu0 0.0
    %404 = vmatpush1.xpose.msra.mxu0 0.0
    %405 = vmatprep.subr.mxu0 0.0
    %406 = vmatpush1.xpose.msra.mxu0 0.0
    %407 = vmatprep.mubr.f32.mxu0 0.0
    %408 = vmatmul.mubr.f32.gmra.mrb[0].mxu0 %v339
    %v409 = vpop.f32.mrb[0].mxu0
    %v410 = vadd.f32 %v333, %v409
    %v411 = vpop.f32.mrb[0].mxu0
    %412 = vdwg.mxu0
    %v413 = vsel %vm338, %v109, 0
    %v415 = vsel %vm338, %v192, 0
    %417 = vmatprep.subr.mxu0 0.0
    %418 = vmatpush1.xpose.msra.mxu0 %v415
    %419 = vmatprep.subr.mxu0 0.0
    %420 = vmatpush1.xpose.msra.mxu0 0.0
    %421 = vmatprep.subr.mxu0 0.0
    %422 = vmatpush1.xpose.msra.mxu0 0.0
    %423 = vmatprep.subr.mxu0 0.0
    %424 = vmatpush1.xpose.msra.mxu0 0.0
    %425 = vmatprep.subr.mxu0 0.0
    %426 = vmatpush1.xpose.msra.mxu0 0.0
    %427 = vmatprep.subr.mxu0 0.0
    %428 = vmatpush1.xpose.msra.mxu0 0.0
    %429 = vmatprep.subr.mxu0 0.0
    %430 = vmatpush1.xpose.msra.mxu0 0.0
    %431 = vmatprep.subr.mxu0 0.0
    %432 = vmatpush1.xpose.msra.mxu0 0.0
    %433 = vmatprep.subr.mxu0 0.0
    %434 = vmatpush1.xpose.msra.mxu0 0.0
    %435 = vmatprep.subr.mxu0 0.0
    %436 = vmatpush1.xpose.msra.mxu0 0.0
    %437 = vmatprep.subr.mxu0 0.0
    %438 = vmatpush1.xpose.msra.mxu0 0.0
    %439 = vmatprep.subr.mxu0 0.0
    %440 = vmatpush1.xpose.msra.mxu0 0.0
    %441 = vmatprep.subr.mxu0 0.0
    %442 = vmatpush1.xpose.msra.mxu0 0.0
    %443 = vmatprep.subr.mxu0 0.0
    %444 = vmatpush1.xpose.msra.mxu0 0.0
    %445 = vmatprep.subr.mxu0 0.0
    %446 = vmatpush1.xpose.msra.mxu0 0.0
    %447 = vmatprep.subr.mxu0 0.0
    %448 = vmatpush1.xpose.msra.mxu0 0.0
    %449 = vmatprep.subr.mxu0 0.0
    %450 = vmatpush1.xpose.msra.mxu0 0.0
    %451 = vmatprep.subr.mxu0 0.0
    %452 = vmatpush1.xpose.msra.mxu0 0.0
    %453 = vmatprep.subr.mxu0 0.0
    %454 = vmatpush1.xpose.msra.mxu0 0.0
    %455 = vmatprep.subr.mxu0 0.0
    %456 = vmatpush1.xpose.msra.mxu0 0.0
    %457 = vmatprep.subr.mxu0 0.0
    %458 = vmatpush1.xpose.msra.mxu0 0.0
    %459 = vmatprep.subr.mxu0 0.0
    %460 = vmatpush1.xpose.msra.mxu0 0.0
    %461 = vmatprep.subr.mxu0 0.0
    %462 = vmatpush1.xpose.msra.mxu0 0.0
    %463 = vmatprep.subr.mxu0 0.0
    %464 = vmatpush1.xpose.msra.mxu0 0.0
    %465 = vmatprep.subr.mxu0 0.0
    %466 = vmatpush1.xpose.msra.mxu0 0.0
    %467 = vmatprep.subr.mxu0 0.0
    %468 = vmatpush1.xpose.msra.mxu0 0.0
    %469 = vmatprep.subr.mxu0 0.0
    %470 = vmatpush1.xpose.msra.mxu0 0.0
    %471 = vmatprep.subr.mxu0 0.0
    %472 = vmatpush1.xpose.msra.mxu0 0.0
    %473 = vmatprep.subr.mxu0 0.0
    %474 = vmatpush1.xpose.msra.mxu0 0.0
    %475 = vmatprep.subr.mxu0 0.0
    %476 = vmatpush1.xpose.msra.mxu0 0.0
    %477 = vmatprep.subr.mxu0 0.0
    %478 = vmatpush1.xpose.msra.mxu0 0.0
    %479 = vmatprep.subr.mxu0 0.0
    %480 = vmatpush1.xpose.msra.mxu0 0.0
    %481 = vmatprep.mubr.f32.mxu0 0.0
    %482 = vmatmul.mubr.f32.gmra.mrb[0].mxu0 %v413
    %v483 = vpop.f32.mrb[0].mxu0
    %v484 = vadd.f32 %v337, %v483
    %v485 = vpop.f32.mrb[0].mxu0
    %486 = vdwg.mxu0
    %v487 = vsel %vm338, %v281, 0
    %v489 = vsel %vm338, %v295, 0
    %491 = vmatprep.subr.mxu0 0.0
    %492 = vmatpush1.xpose.msra.mxu0 %v489
    %493 = vmatprep.subr.mxu0 0.0
    %494 = vmatpush1.xpose.msra.mxu0 0.0
    %495 = vmatprep.subr.mxu0 0.0
    %496 = vmatpush1.xpose.msra.mxu0 0.0
    %497 = vmatprep.subr.mxu0 0.0
    %498 = vmatpush1.xpose.msra.mxu0 0.0
    %499 = vmatprep.subr.mxu0 0.0
    %500 = vmatpush1.xpose.msra.mxu0 0.0
    %501 = vmatprep.subr.mxu0 0.0
    %502 = vmatpush1.xpose.msra.mxu0 0.0
    %503 = vmatprep.subr.mxu0 0.0
    %504 = vmatpush1.xpose.msra.mxu0 0.0
    %505 = vmatprep.subr.mxu0 0.0
    %506 = vmatpush1.xpose.msra.mxu0 0.0
    %507 = vmatprep.subr.mxu0 0.0
    %508 = vmatpush1.xpose.msra.mxu0 0.0
    %509 = vmatprep.subr.mxu0 0.0
    %510 = vmatpush1.xpose.msra.mxu0 0.0
    %511 = vmatprep.subr.mxu0 0.0
    %512 = vmatpush1.xpose.msra.mxu0 0.0
    %513 = vmatprep.subr.mxu0 0.0
    %514 = vmatpush1.xpose.msra.mxu0 0.0
    %515 = vmatprep.subr.mxu0 0.0
    %516 = vmatpush1.xpose.msra.mxu0 0.0
    %517 = vmatprep.subr.mxu0 0.0
    %518 = vmatpush1.xpose.msra.mxu0 0.0
    %519 = vmatprep.subr.mxu0 0.0
    %520 = vmatpush1.xpose.msra.mxu0 0.0
    %521 = vmatprep.subr.mxu0 0.0
    %522 = vmatpush1.xpose.msra.mxu0 0.0
    %523 = vmatprep.subr.mxu0 0.0
    %524 = vmatpush1.xpose.msra.mxu0 0.0
    %525 = vmatprep.subr.mxu0 0.0
    %526 = vmatpush1.xpose.msra.mxu0 0.0
    %527 = vmatprep.subr.mxu0 0.0
    %528 = vmatpush1.xpose.msra.mxu0 0.0
    %529 = vmatprep.subr.mxu0 0.0
    %530 = vmatpush1.xpose.msra.mxu0 0.0
    %531 = vmatprep.subr.mxu0 0.0
    %532 = vmatpush1.xpose.msra.mxu0 0.0
    %533 = vmatprep.subr.mxu0 0.0
    %534 = vmatpush1.xpose.msra.mxu0 0.0
    %535 = vmatprep.subr.mxu0 0.0
    %536 = vmatpush1.xpose.msra.mxu0 0.0
    %537 = vmatprep.subr.mxu0 0.0
    %538 = vmatpush1.xpose.msra.mxu0 0.0
    %539 = vmatprep.subr.mxu0 0.0
    %540 = vmatpush1.xpose.msra.mxu0 0.0
    %541 = vmatprep.subr.mxu0 0.0
    %542 = vmatpush1.xpose.msra.mxu0 0.0
    %543 = vmatprep.subr.mxu0 0.0
    %544 = vmatpush1.xpose.msra.mxu0 0.0
    %545 = vmatprep.subr.mxu0 0.0
    %546 = vmatpush1.xpose.msra.mxu0 0.0
    %547 = vmatprep.subr.mxu0 0.0
    %548 = vmatpush1.xpose.msra.mxu0 0.0
    %549 = vmatprep.subr.mxu0 0.0
    %550 = vmatpush1.xpose.msra.mxu0 0.0
    %551 = vmatprep.subr.mxu0 0.0
    %552 = vmatpush1.xpose.msra.mxu0 0.0
    %553 = vmatprep.subr.mxu0 0.0
    %554 = vmatpush1.xpose.msra.mxu0 0.0
    %555 = vmatprep.mubr.f32.mxu0 0.0
    %556 = vmatmul.mubr.f32.gmra.mrb[0].mxu0 %v487
    %v557 = vpop.f32.mrb[0].mxu0
    %v558 = vadd.f32 %v333, %v557
    %v559 = vpop.f32.mrb[0].mxu0
    %560 = vdwg.mxu0
    %v561 = vsel %vm338, %v283, 0
    %v563 = vsel %vm338, %v297, 0
    %565 = vmatprep.subr.mxu0 0.0
    %566 = vmatpush1.xpose.msra.mxu0 %v563
    %567 = vmatprep.subr.mxu0 0.0
    %568 = vmatpush1.xpose.msra.mxu0 0.0
    %569 = vmatprep.subr.mxu0 0.0
    %570 = vmatpush1.xpose.msra.mxu0 0.0
    %571 = vmatprep.subr.mxu0 0.0
    %572 = vmatpush1.xpose.msra.mxu0 0.0
    %573 = vmatprep.subr.mxu0 0.0
    %574 = vmatpush1.xpose.msra.mxu0 0.0
    %575 = vmatprep.subr.mxu0 0.0
    %576 = vmatpush1.xpose.msra.mxu0 0.0
    %577 = vmatprep.subr.mxu0 0.0
    %578 = vmatpush1.xpose.msra.mxu0 0.0
    %579 = vmatprep.subr.mxu0 0.0
    %580 = vmatpush1.xpose.msra.mxu0 0.0
    %581 = vmatprep.subr.mxu0 0.0
    %582 = vmatpush1.xpose.msra.mxu0 0.0
    %583 = vmatprep.subr.mxu0 0.0
    %584 = vmatpush1.xpose.msra.mxu0 0.0
    %585 = vmatprep.subr.mxu0 0.0
    %586 = vmatpush1.xpose.msra.mxu0 0.0
    %587 = vmatprep.subr.mxu0 0.0
    %588 = vmatpush1.xpose.msra.mxu0 0.0
    %589 = vmatprep.subr.mxu0 0.0
    %590 = vmatpush1.xpose.msra.mxu0 0.0
    %591 = vmatprep.subr.mxu0 0.0
    %592 = vmatpush1.xpose.msra.mxu0 0.0
    %593 = vmatprep.subr.mxu0 0.0
    %594 = vmatpush1.xpose.msra.mxu0 0.0
    %595 = vmatprep.subr.mxu0 0.0
    %596 = vmatpush1.xpose.msra.mxu0 0.0
    %597 = vmatprep.subr.mxu0 0.0
    %598 = vmatpush1.xpose.msra.mxu0 0.0
    %599 = vmatprep.subr.mxu0 0.0
    %600 = vmatpush1.xpose.msra.mxu0 0.0
    %601 = vmatprep.subr.mxu0 0.0
    %602 = vmatpush1.xpose.msra.mxu0 0.0
    %603 = vmatprep.subr.mxu0 0.0
    %604 = vmatpush1.xpose.msra.mxu0 0.0
    %605 = vmatprep.subr.mxu0 0.0
    %606 = vmatpush1.xpose.msra.mxu0 0.0
    %607 = vmatprep.subr.mxu0 0.0
    %608 = vmatpush1.xpose.msra.mxu0 0.0
    %609 = vmatprep.subr.mxu0 0.0
    %610 = vmatpush1.xpose.msra.mxu0 0.0
    %611 = vmatprep.subr.mxu0 0.0
    %612 = vmatpush1.xpose.msra.mxu0 0.0
    %613 = vmatprep.subr.mxu0 0.0
    %614 = vmatpush1.xpose.msra.mxu0 0.0
    %615 = vmatprep.subr.mxu0 0.0
    %616 = vmatpush1.xpose.msra.mxu0 0.0
    %617 = vmatprep.subr.mxu0 0.0
    %618 = vmatpush1.xpose.msra.mxu0 0.0
    %619 = vmatprep.subr.mxu0 0.0
    %620 = vmatpush1.xpose.msra.mxu0 0.0
    %621 = vmatprep.subr.mxu0 0.0
    %622 = vmatpush1.xpose.msra.mxu0 0.0
    %623 = vmatprep.subr.mxu0 0.0
    %624 = vmatpush1.xpose.msra.mxu0 0.0
    %625 = vmatprep.subr.mxu0 0.0
    %626 = vmatpush1.xpose.msra.mxu0 0.0
    %627 = vmatprep.subr.mxu0 0.0
    %628 = vmatpush1.xpose.msra.mxu0 0.0
    %629 = vmatprep.mubr.f32.mxu0 0.0
    %630 = vmatmul.mubr.f32.gmra.mrb[0].mxu0 %v561
    %v631 = vpop.f32.mrb[0].mxu0
    %v632 = vadd.f32 %v337, %v631
    %v633 = vpop.f32.mrb[0].mxu0
    %634 = vdwg.mxu0
    %v635 = vsel %vm338, %v285, 0
    %v637 = vsel %vm338, %v299, 0
    %639 = vmatprep.subr.mxu0 0.0
    %640 = vmatpush1.xpose.msra.mxu0 %v637
    %641 = vmatprep.subr.mxu0 0.0
    %642 = vmatpush1.xpose.msra.mxu0 0.0
    %643 = vmatprep.subr.mxu0 0.0
    %644 = vmatpush1.xpose.msra.mxu0 0.0
    %645 = vmatprep.subr.mxu0 0.0
    %646 = vmatpush1.xpose.msra.mxu0 0.0
    %647 = vmatprep.subr.mxu0 0.0
    %648 = vmatpush1.xpose.msra.mxu0 0.0
    %649 = vmatprep.subr.mxu0 0.0
    %650 = vmatpush1.xpose.msra.mxu0 0.0
    %651 = vmatprep.subr.mxu0 0.0
    %652 = vmatpush1.xpose.msra.mxu0 0.0
    %653 = vmatprep.subr.mxu0 0.0
    %654 = vmatpush1.xpose.msra.mxu0 0.0
    %655 = vmatprep.subr.mxu0 0.0
    %656 = vmatpush1.xpose.msra.mxu0 0.0
    %657 = vmatprep.subr.mxu0 0.0
    %658 = vmatpush1.xpose.msra.mxu0 0.0
    %659 = vmatprep.subr.mxu0 0.0
    %660 = vmatpush1.xpose.msra.mxu0 0.0
    %661 = vmatprep.subr.mxu0 0.0
    %662 = vmatpush1.xpose.msra.mxu0 0.0
    %663 = vmatprep.subr.mxu0 0.0
    %664 = vmatpush1.xpose.msra.mxu0 0.0
    %665 = vmatprep.subr.mxu0 0.0
    %666 = vmatpush1.xpose.msra.mxu0 0.0
    %667 = vmatprep.subr.mxu0 0.0
    %668 = vmatpush1.xpose.msra.mxu0 0.0
    %669 = vmatprep.subr.mxu0 0.0
    %670 = vmatpush1.xpose.msra.mxu0 0.0
    %671 = vmatprep.subr.mxu0 0.0
    %672 = vmatpush1.xpose.msra.mxu0 0.0
    %673 = vmatprep.subr.mxu0 0.0
    %674 = vmatpush1.xpose.msra.mxu0 0.0
    %675 = vmatprep.subr.mxu0 0.0
    %676 = vmatpush1.xpose.msra.mxu0 0.0
    %677 = vmatprep.subr.mxu0 0.0
    %678 = vmatpush1.xpose.msra.mxu0 0.0
    %679 = vmatprep.subr.mxu0 0.0
    %680 = vmatpush1.xpose.msra.mxu0 0.0
    %681 = vmatprep.subr.mxu0 0.0
    %682 = vmatpush1.xpose.msra.mxu0 0.0
    %683 = vmatprep.subr.mxu0 0.0
    %684 = vmatpush1.xpose.msra.mxu0 0.0
    %685 = vmatprep.subr.mxu0 0.0
    %686 = vmatpush1.xpose.msra.mxu0 0.0
    %687 = vmatprep.subr.mxu0 0.0
    %688 = vmatpush1.xpose.msra.mxu0 0.0
    %689 = vmatprep.subr.mxu0 0.0
    %690 = vmatpush1.xpose.msra.mxu0 0.0
    %691 = vmatprep.subr.mxu0 0.0
    %692 = vmatpush1.xpose.msra.mxu0 0.0
    %693 = vmatprep.subr.mxu0 0.0
    %694 = vmatpush1.xpose.msra.mxu0 0.0
    %695 = vmatprep.subr.mxu0 0.0
    %696 = vmatpush1.xpose.msra.mxu0 0.0
    %697 = vmatprep.subr.mxu0 0.0
    %698 = vmatpush1.xpose.msra.mxu0 0.0
    %699 = vmatprep.subr.mxu0 0.0
    %700 = vmatpush1.xpose.msra.mxu0 0.0
    %701 = vmatprep.subr.mxu0 0.0
    %702 = vmatpush1.xpose.msra.mxu0 0.0
    %703 = vmatprep.mubr.f32.mxu0 0.0
    %704 = vmatmul.mubr.f32.gmra.mrb[0].mxu0 %v635
    %v705 = vpop.f32.mrb[0].mxu0
    %v706 = vadd.f32 %v333, %v705
    %v707 = vpop.f32.mrb[0].mxu0
    %708 = vdwg.mxu0
    %v709 = vsel %vm338, %v287, 0
    %v711 = vsel %vm338, %v301, 0
    %713 = vmatprep.subr.mxu0 0.0
    %714 = vmatpush1.xpose.msra.mxu0 %v711
    %715 = vmatprep.subr.mxu0 0.0
    %716 = vmatpush1.xpose.msra.mxu0 0.0
    %717 = vmatprep.subr.mxu0 0.0
    %718 = vmatpush1.xpose.msra.mxu0 0.0
    %719 = vmatprep.subr.mxu0 0.0
    %720 = vmatpush1.xpose.msra.mxu0 0.0
    %721 = vmatprep.subr.mxu0 0.0
    %722 = vmatpush1.xpose.msra.mxu0 0.0
    %723 = vmatprep.subr.mxu0 0.0
    %724 = vmatpush1.xpose.msra.mxu0 0.0
    %725 = vmatprep.subr.mxu0 0.0
    %726 = vmatpush1.xpose.msra.mxu0 0.0
    %727 = vmatprep.subr.mxu0 0.0
    %728 = vmatpush1.xpose.msra.mxu0 0.0
    %729 = vmatprep.subr.mxu0 0.0
    %730 = vmatpush1.xpose.msra.mxu0 0.0
    %731 = vmatprep.subr.mxu0 0.0
    %732 = vmatpush1.xpose.msra.mxu0 0.0
    %733 = vmatprep.subr.mxu0 0.0
    %734 = vmatpush1.xpose.msra.mxu0 0.0
    %735 = vmatprep.subr.mxu0 0.0
    %736 = vmatpush1.xpose.msra.mxu0 0.0
    %737 = vmatprep.subr.mxu0 0.0
    %738 = vmatpush1.xpose.msra.mxu0 0.0
    %739 = vmatprep.subr.mxu0 0.0
    %740 = vmatpush1.xpose.msra.mxu0 0.0
    %741 = vmatprep.subr.mxu0 0.0
    %742 = vmatpush1.xpose.msra.mxu0 0.0
    %743 = vmatprep.subr.mxu0 0.0
    %744 = vmatpush1.xpose.msra.mxu0 0.0
    %745 = vmatprep.subr.mxu0 0.0
    %746 = vmatpush1.xpose.msra.mxu0 0.0
    %747 = vmatprep.subr.mxu0 0.0
    %748 = vmatpush1.xpose.msra.mxu0 0.0
    %749 = vmatprep.subr.mxu0 0.0
    %750 = vmatpush1.xpose.msra.mxu0 0.0
    %751 = vmatprep.subr.mxu0 0.0
    %752 = vmatpush1.xpose.msra.mxu0 0.0
    %753 = vmatprep.subr.mxu0 0.0
    %754 = vmatpush1.xpose.msra.mxu0 0.0
    %755 = vmatprep.subr.mxu0 0.0
    %756 = vmatpush1.xpose.msra.mxu0 0.0
    %757 = vmatprep.subr.mxu0 0.0
    %758 = vmatpush1.xpose.msra.mxu0 0.0
    %759 = vmatprep.subr.mxu0 0.0
    %760 = vmatpush1.xpose.msra.mxu0 0.0
    %761 = vmatprep.subr.mxu0 0.0
    %762 = vmatpush1.xpose.msra.mxu0 0.0
    %763 = vmatprep.subr.mxu0 0.0
    %764 = vmatpush1.xpose.msra.mxu0 0.0
    %765 = vmatprep.subr.mxu0 0.0
    %766 = vmatpush1.xpose.msra.mxu0 0.0
    %767 = vmatprep.subr.mxu0 0.0
    %768 = vmatpush1.xpose.msra.mxu0 0.0
    %769 = vmatprep.subr.mxu0 0.0
    %770 = vmatpush1.xpose.msra.mxu0 0.0
    %771 = vmatprep.subr.mxu0 0.0
    %772 = vmatpush1.xpose.msra.mxu0 0.0
    %773 = vmatprep.subr.mxu0 0.0
    %774 = vmatpush1.xpose.msra.mxu0 0.0
    %775 = vmatprep.subr.mxu0 0.0
    %776 = vmatpush1.xpose.msra.mxu0 0.0
    %777 = vmatprep.mubr.f32.mxu0 0.0
    %778 = vmatmul.mubr.f32.gmra.mrb[0].mxu0 %v709
    %v779 = vpop.f32.mrb[0].mxu0
    %v780 = vadd.f32 %v337, %v779
    %v781 = vpop.f32.mrb[0].mxu0
    %782 = vdwg.mxu0
    %v783 = vsel %vm338, %v289, 0
    %v785 = vsel %vm338, %v303, 0
    %787 = vmatprep.subr.mxu0 0.0
    %788 = vmatpush1.xpose.msra.mxu0 %v785
    %789 = vmatprep.subr.mxu0 0.0
    %790 = vmatpush1.xpose.msra.mxu0 0.0
    %791 = vmatprep.subr.mxu0 0.0
    %792 = vmatpush1.xpose.msra.mxu0 0.0
    %793 = vmatprep.subr.mxu0 0.0
    %794 = vmatpush1.xpose.msra.mxu0 0.0
    %795 = vmatprep.subr.mxu0 0.0
    %796 = vmatpush1.xpose.msra.mxu0 0.0
    %797 = vmatprep.subr.mxu0 0.0
    %798 = vmatpush1.xpose.msra.mxu0 0.0
    %799 = vmatprep.subr.mxu0 0.0
    %800 = vmatpush1.xpose.msra.mxu0 0.0
    %801 = vmatprep.subr.mxu0 0.0
    %802 = vmatpush1.xpose.msra.mxu0 0.0
    %803 = vmatprep.subr.mxu0 0.0
    %804 = vmatpush1.xpose.msra.mxu0 0.0
    %805 = vmatprep.subr.mxu0 0.0
    %806 = vmatpush1.xpose.msra.mxu0 0.0
    %807 = vmatprep.subr.mxu0 0.0
    %808 = vmatpush1.xpose.msra.mxu0 0.0
    %809 = vmatprep.subr.mxu0 0.0
    %810 = vmatpush1.xpose.msra.mxu0 0.0
    %811 = vmatprep.subr.mxu0 0.0
    %812 = vmatpush1.xpose.msra.mxu0 0.0
    %813 = vmatprep.subr.mxu0 0.0
    %814 = vmatpush1.xpose.msra.mxu0 0.0
    %815 = vmatprep.subr.mxu0 0.0
    %816 = vmatpush1.xpose.msra.mxu0 0.0
    %817 = vmatprep.subr.mxu0 0.0
    %818 = vmatpush1.xpose.msra.mxu0 0.0
    %819 = vmatprep.subr.mxu0 0.0
    %820 = vmatpush1.xpose.msra.mxu0 0.0
    %821 = vmatprep.subr.mxu0 0.0
    %822 = vmatpush1.xpose.msra.mxu0 0.0
    %823 = vmatprep.subr.mxu0 0.0
    %824 = vmatpush1.xpose.msra.mxu0 0.0
    %825 = vmatprep.subr.mxu0 0.0
    %826 = vmatpush1.xpose.msra.mxu0 0.0
    %827 = vmatprep.subr.mxu0 0.0
    %828 = vmatpush1.xpose.msra.mxu0 0.0
    %829 = vmatprep.subr.mxu0 0.0
    %830 = vmatpush1.xpose.msra.mxu0 0.0
    %831 = vmatprep.subr.mxu0 0.0
    %832 = vmatpush1.xpose.msra.mxu0 0.0
    %833 = vmatprep.subr.mxu0 0.0
    %834 = vmatpush1.xpose.msra.mxu0 0.0
    %835 = vmatprep.subr.mxu0 0.0
    %836 = vmatpush1.xpose.msra.mxu0 0.0
    %837 = vmatprep.subr.mxu0 0.0
    %838 = vmatpush1.xpose.msra.mxu0 0.0
    %839 = vmatprep.subr.mxu0 0.0
    %840 = vmatpush1.xpose.msra.mxu0 0.0
    %841 = vmatprep.subr.mxu0 0.0
    %842 = vmatpush1.xpose.msra.mxu0 0.0
    %843 = vmatprep.subr.mxu0 0.0
    %844 = vmatpush1.xpose.msra.mxu0 0.0
    %845 = vmatprep.subr.mxu0 0.0
    %846 = vmatpush1.xpose.msra.mxu0 0.0
    %847 = vmatprep.subr.mxu0 0.0
    %848 = vmatpush1.xpose.msra.mxu0 0.0
    %849 = vmatprep.subr.mxu0 0.0
    %850 = vmatpush1.xpose.msra.mxu0 0.0
    %851 = vmatprep.mubr.f32.mxu0 0.0
    %852 = vmatmul.mubr.f32.gmra.mrb[0].mxu0 %v783
    %v853 = vpop.f32.mrb[0].mxu0
    %v854 = vadd.f32 %v333, %v853
    %v855 = vpop.f32.mrb[0].mxu0
    %856 = vdwg.mxu0
    %v857 = vsel %vm338, %v291, 0
    %v859 = vsel %vm338, %v305, 0
    %861 = vmatprep.subr.mxu0 0.0
    %862 = vmatpush1.xpose.msra.mxu0 %v859
    %863 = vmatprep.subr.mxu0 0.0
    %864 = vmatpush1.xpose.msra.mxu0 0.0
    %865 = vmatprep.subr.mxu0 0.0
    %866 = vmatpush1.xpose.msra.mxu0 0.0
    %867 = vmatprep.subr.mxu0 0.0
    %868 = vmatpush1.xpose.msra.mxu0 0.0
    %869 = vmatprep.subr.mxu0 0.0
    %870 = vmatpush1.xpose.msra.mxu0 0.0
    %871 = vmatprep.subr.mxu0 0.0
    %872 = vmatpush1.xpose.msra.mxu0 0.0
    %873 = vmatprep.subr.mxu0 0.0
    %874 = vmatpush1.xpose.msra.mxu0 0.0
    %875 = vmatprep.subr.mxu0 0.0
    %876 = vmatpush1.xpose.msra.mxu0 0.0
    %877 = vmatprep.subr.mxu0 0.0
    %878 = vmatpush1.xpose.msra.mxu0 0.0
    %879 = vmatprep.subr.mxu0 0.0
    %880 = vmatpush1.xpose.msra.mxu0 0.0
    %881 = vmatprep.subr.mxu0 0.0
    %882 = vmatpush1.xpose.msra.mxu0 0.0
    %883 = vmatprep.subr.mxu0 0.0
    %884 = vmatpush1.xpose.msra.mxu0 0.0
    %885 = vmatprep.subr.mxu0 0.0
    %886 = vmatpush1.xpose.msra.mxu0 0.0
    %887 = vmatprep.subr.mxu0 0.0
    %888 = vmatpush1.xpose.msra.mxu0 0.0
    %889 = vmatprep.subr.mxu0 0.0
    %890 = vmatpush1.xpose.msra.mxu0 0.0
    %891 = vmatprep.subr.mxu0 0.0
    %892 = vmatpush1.xpose.msra.mxu0 0.0
    %893 = vmatprep.subr.mxu0 0.0
    %894 = vmatpush1.xpose.msra.mxu0 0.0
    %895 = vmatprep.subr.mxu0 0.0
    %896 = vmatpush1.xpose.msra.mxu0 0.0
    %897 = vmatprep.subr.mxu0 0.0
    %898 = vmatpush1.xpose.msra.mxu0 0.0
    %899 = vmatprep.subr.mxu0 0.0
    %900 = vmatpush1.xpose.msra.mxu0 0.0
    %901 = vmatprep.subr.mxu0 0.0
    %902 = vmatpush1.xpose.msra.mxu0 0.0
    %903 = vmatprep.subr.mxu0 0.0
    %904 = vmatpush1.xpose.msra.mxu0 0.0
    %905 = vmatprep.subr.mxu0 0.0
    %906 = vmatpush1.xpose.msra.mxu0 0.0
    %907 = vmatprep.subr.mxu0 0.0
    %908 = vmatpush1.xpose.msra.mxu0 0.0
    %909 = vmatprep.subr.mxu0 0.0
    %910 = vmatpush1.xpose.msra.mxu0 0.0
    %911 = vmatprep.subr.mxu0 0.0
    %912 = vmatpush1.xpose.msra.mxu0 0.0
    %913 = vmatprep.subr.mxu0 0.0
    %914 = vmatpush1.xpose.msra.mxu0 0.0
    %915 = vmatprep.subr.mxu0 0.0
    %916 = vmatpush1.xpose.msra.mxu0 0.0
    %917 = vmatprep.subr.mxu0 0.0
    %918 = vmatpush1.xpose.msra.mxu0 0.0
    %919 = vmatprep.subr.mxu0 0.0
    %920 = vmatpush1.xpose.msra.mxu0 0.0
    %921 = vmatprep.subr.mxu0 0.0
    %922 = vmatpush1.xpose.msra.mxu0 0.0
    %923 = vmatprep.subr.mxu0 0.0
    %924 = vmatpush1.xpose.msra.mxu0 0.0
    %925 = vmatprep.mubr.f32.mxu0 0.0
    %926 = vmatmul.mubr.f32.gmra.mrb[0].mxu0 %v857
    %v927 = vpop.f32.mrb[0].mxu0
    %v928 = vadd.f32 %v337, %v927
    %v929 = vpop.f32.mrb[0].mxu0
    %930 = vdwg.mxu0
    %v931 = vsel %vm338, %v410, -inf
    %932 = vmax.xlane.f32.xlu0 %v931
    %v933 = vpop.xlane.xlu0 %932
    %v934 = vsel %vm338, %v484, -inf
    %935 = vmax.xlane.f32.xlu0 %v934
    %v936 = vpop.xlane.xlu0 %935
    %v937 = vsel %vm338, %v558, -inf
    %938 = vmax.xlane.f32.xlu0 %v937
    %v939 = vpop.xlane.xlu0 %938
    %v940 = vsel %vm338, %v632, -inf
    %941 = vmax.xlane.f32.xlu0 %v940
    %v942 = vpop.xlane.xlu0 %941
    %v943 = vsel %vm338, %v706, -inf
    %944 = vmax.xlane.f32.xlu0 %v943
    %v945 = vpop.xlane.xlu0 %944
    %v946 = vsel %vm338, %v780, -inf
    %947 = vmax.xlane.f32.xlu0 %v946
    %v948 = vpop.xlane.xlu0 %947
    %v949 = vsel %vm338, %v854, -inf
    %950 = vmax.xlane.f32.xlu0 %v949
    %v951 = vpop.xlane.xlu0 %950
    %v952 = vsel %vm338, %v928, -inf
    %953 = vmax.xlane.f32.xlu0 %v952
    %v954 = vpop.xlane.xlu0 %953
    %v955 = vsub.f32 %v410, %v933
    %v956 = vsub.f32 %v484, %v936
    %v957 = vsub.f32 %v558, %v939
    %v958 = vsub.f32 %v632, %v942
    %v959 = vsub.f32 %v706, %v945
    %v960 = vsub.f32 %v780, %v948
    %v961 = vsub.f32 %v854, %v951
    %v962 = vsub.f32 %v928, %v954
    %v963 = vmul.f32 %v955, 1.442695
    %v964 = vpow.pop %v963
    %v965 = vmul.f32 %v956, 1.442695
    %v966 = vpow.pop %v965
    %v967 = vmul.f32 %v957, 1.442695
    %v968 = vpow.pop %v967
    %v969 = vmul.f32 %v958, 1.442695
    %v970 = vpow.pop %v969
    %v971 = vmul.f32 %v959, 1.442695
    %v972 = vpow.pop %v971
    %v973 = vmul.f32 %v960, 1.442695
    %v974 = vpow.pop %v973
    %v975 = vmul.f32 %v961, 1.442695
    %v976 = vpow.pop %v975
    %v977 = vmul.f32 %v962, 1.442695
    %v978 = vpow.pop %v977
    %v979 = vsel %vm338, %v964, 0.0
    %980 = vadd.xlane.f32.xlu0 %v979
    %v981 = vpop.xlane.xlu0 %980
    %v982 = vsel %vm338, %v966, 0.0
    %983 = vadd.xlane.f32.xlu0 %v982
    %v984 = vpop.xlane.xlu0 %983
    %v985 = vsel %vm338, %v968, 0.0
    %986 = vadd.xlane.f32.xlu0 %v985
    %v987 = vpop.xlane.xlu0 %986
    %v988 = vsel %vm338, %v970, 0.0
    %989 = vadd.xlane.f32.xlu0 %v988
    %v990 = vpop.xlane.xlu0 %989
    %v991 = vsel %vm338, %v972, 0.0
    %992 = vadd.xlane.f32.xlu0 %v991
    %v993 = vpop.xlane.xlu0 %992
    %v994 = vsel %vm338, %v974, 0.0
    %995 = vadd.xlane.f32.xlu0 %v994
    %v996 = vpop.xlane.xlu0 %995
    %v997 = vsel %vm338, %v976, 0.0
    %998 = vadd.xlane.f32.xlu0 %v997
    %v999 = vpop.xlane.xlu0 %998
    %v1000 = vsel %vm338, %v978, 0.0
    %1001 = vadd.xlane.f32.xlu0 %v1000
    %v1002 = vpop.xlane.xlu0 %1001
    %v1003 = vrcp.pop %v981
    %v1004 = vmul.f32 %v964, %v1003
    %v1005 = vrcp.pop %v984
    %v1006 = vmul.f32 %v966, %v1005
    %v1007 = vrcp.pop %v987
    %v1008 = vmul.f32 %v968, %v1007
    %v1009 = vrcp.pop %v990
    %v1010 = vmul.f32 %v970, %v1009
    %v1011 = vrcp.pop %v993
    %v1012 = vmul.f32 %v972, %v1011
    %v1013 = vrcp.pop %v996
    %v1014 = vmul.f32 %v974, %v1013
    %v1015 = vrcp.pop %v999
    %v1016 = vmul.f32 %v976, %v1015
    %v1017 = vrcp.pop %v1002
    %v1018 = vmul.f32 %v978, %v1017
    %v1020 = vsel %vm338, %v1004, 0
    %1022 = vmatprep.subr.mxu0 0.0
    %1023 = vmatpush1.msra.mxu0 %v270
    %1024 = vmatprep.subr.mxu0 0.0
    %1025 = vmatpush1.msra.mxu0 0.0
    %1026 = vmatprep.subr.mxu0 0.0
    %1027 = vmatpush1.msra.mxu0 0.0
    %1028 = vmatprep.subr.mxu0 0.0
    %1029 = vmatpush1.msra.mxu0 0.0
    %1030 = vmatprep.subr.mxu0 0.0
    %1031 = vmatpush1.msra.mxu0 0.0
    %1032 = vmatprep.subr.mxu0 0.0
    %1033 = vmatpush1.msra.mxu0 0.0
    %1034 = vmatprep.subr.mxu0 0.0
    %1035 = vmatpush1.msra.mxu0 0.0
    %1036 = vmatprep.subr.mxu0 0.0
    %1037 = vmatpush1.msra.mxu0 0.0
    %1038 = vmatprep.subr.mxu0 0.0
    %1039 = vmatpush1.msra.mxu0 0.0
    %1040 = vmatprep.subr.mxu0 0.0
    %1041 = vmatpush1.msra.mxu0 0.0
    %1042 = vmatprep.subr.mxu0 0.0
    %1043 = vmatpush1.msra.mxu0 0.0
    %1044 = vmatprep.subr.mxu0 0.0
    %1045 = vmatpush1.msra.mxu0 0.0
    %1046 = vmatprep.subr.mxu0 0.0
    %1047 = vmatpush1.msra.mxu0 0.0
    %1048 = vmatprep.subr.mxu0 0.0
    %1049 = vmatpush1.msra.mxu0 0.0
    %1050 = vmatprep.subr.mxu0 0.0
    %1051 = vmatpush1.msra.mxu0 0.0
    %1052 = vmatprep.subr.mxu0 0.0
    %1053 = vmatpush1.msra.mxu0 0.0
    %1054 = vmatprep.subr.mxu0 0.0
    %1055 = vmatpush1.msra.mxu0 0.0
    %1056 = vmatprep.subr.mxu0 0.0
    %1057 = vmatpush1.msra.mxu0 0.0
    %1058 = vmatprep.subr.mxu0 0.0
    %1059 = vmatpush1.msra.mxu0 0.0
    %1060 = vmatprep.subr.mxu0 0.0
    %1061 = vmatpush1.msra.mxu0 0.0
    %1062 = vmatprep.subr.mxu0 0.0
    %1063 = vmatpush1.msra.mxu0 0.0
    %1064 = vmatprep.subr.mxu0 0.0
    %1065 = vmatpush1.msra.mxu0 0.0
    %1066 = vmatprep.subr.mxu0 0.0
    %1067 = vmatpush1.msra.mxu0 0.0
    %1068 = vmatprep.subr.mxu0 0.0
    %1069 = vmatpush1.msra.mxu0 0.0
    %1070 = vmatprep.subr.mxu0 0.0
    %1071 = vmatpush1.msra.mxu0 0.0
    %1072 = vmatprep.subr.mxu0 0.0
    %1073 = vmatpush1.msra.mxu0 0.0
    %1074 = vmatprep.subr.mxu0 0.0
    %1075 = vmatpush1.msra.mxu0 0.0
    %1076 = vmatprep.subr.mxu0 0.0
    %1077 = vmatpush1.msra.mxu0 0.0
    %1078 = vmatprep.subr.mxu0 0.0
    %1079 = vmatpush1.msra.mxu0 0.0
    %1080 = vmatprep.subr.mxu0 0.0
    %1081 = vmatpush1.msra.mxu0 0.0
    %1082 = vmatprep.subr.mxu0 0.0
    %1083 = vmatpush1.msra.mxu0 0.0
    %1084 = vmatprep.subr.mxu0 0.0
    %1085 = vmatpush1.msra.mxu0 0.0
    %1086 = vmatprep.mubr.f32.mxu0 0.0
    %1087 = vmatmul.mubr.f32.gmra.mrb[0].mxu0 %v1020
    %v1088 = vpop.f32.mrb[0].mxu0
    %v1089 = vadd.f32 0.0, %v1088
    %v1090 = vpop.f32.mrb[0].mxu0
    %1091 = vdwg.mxu0
    %v1093 = vsel %vm338, %v1006, 0
    %1095 = vmatprep.subr.mxu0 0.0
    %1096 = vmatpush1.msra.mxu0 %v275
    %1097 = vmatprep.subr.mxu0 0.0
    %1098 = vmatpush1.msra.mxu0 0.0
    %1099 = vmatprep.subr.mxu0 0.0
    %1100 = vmatpush1.msra.mxu0 0.0
    %1101 = vmatprep.subr.mxu0 0.0
    %1102 = vmatpush1.msra.mxu0 0.0
    %1103 = vmatprep.subr.mxu0 0.0
    %1104 = vmatpush1.msra.mxu0 0.0
    %1105 = vmatprep.subr.mxu0 0.0
    %1106 = vmatpush1.msra.mxu0 0.0
    %1107 = vmatprep.subr.mxu0 0.0
    %1108 = vmatpush1.msra.mxu0 0.0
    %1109 = vmatprep.subr.mxu0 0.0
    %1110 = vmatpush1.msra.mxu0 0.0
    %1111 = vmatprep.subr.mxu0 0.0
    %1112 = vmatpush1.msra.mxu0 0.0
    %1113 = vmatprep.subr.mxu0 0.0
    %1114 = vmatpush1.msra.mxu0 0.0
    %1115 = vmatprep.subr.mxu0 0.0
    %1116 = vmatpush1.msra.mxu0 0.0
    %1117 = vmatprep.subr.mxu0 0.0
    %1118 = vmatpush1.msra.mxu0 0.0
    %1119 = vmatprep.subr.mxu0 0.0
    %1120 = vmatpush1.msra.mxu0 0.0
    %1121 = vmatprep.subr.mxu0 0.0
    %1122 = vmatpush1.msra.mxu0 0.0
    %1123 = vmatprep.subr.mxu0 0.0
    %1124 = vmatpush1.msra.mxu0 0.0
    %1125 = vmatprep.subr.mxu0 0.0
    %1126 = vmatpush1.msra.mxu0 0.0
    %1127 = vmatprep.subr.mxu0 0.0
    %1128 = vmatpush1.msra.mxu0 0.0
    %1129 = vmatprep.subr.mxu0 0.0
    %1130 = vmatpush1.msra.mxu0 0.0
    %1131 = vmatprep.subr.mxu0 0.0
    %1132 = vmatpush1.msra.mxu0 0.0
    %1133 = vmatprep.subr.mxu0 0.0
    %1134 = vmatpush1.msra.mxu0 0.0
    %1135 = vmatprep.subr.mxu0 0.0
    %1136 = vmatpush1.msra.mxu0 0.0
    %1137 = vmatprep.subr.mxu0 0.0
    %1138 = vmatpush1.msra.mxu0 0.0
    %1139 = vmatprep.subr.mxu0 0.0
    %1140 = vmatpush1.msra.mxu0 0.0
    %1141 = vmatprep.subr.mxu0 0.0
    %1142 = vmatpush1.msra.mxu0 0.0
    %1143 = vmatprep.subr.mxu0 0.0
    %1144 = vmatpush1.msra.mxu0 0.0
    %1145 = vmatprep.subr.mxu0 0.0
    %1146 = vmatpush1.msra.mxu0 0.0
    %1147 = vmatprep.subr.mxu0 0.0
    %1148 = vmatpush1.msra.mxu0 0.0
    %1149 = vmatprep.subr.mxu0 0.0
    %1150 = vmatpush1.msra.mxu0 0.0
    %1151 = vmatprep.subr.mxu0 0.0
    %1152 = vmatpush1.msra.mxu0 0.0
    %1153 = vmatprep.subr.mxu0 0.0
    %1154 = vmatpush1.msra.mxu0 0.0
    %1155 = vmatprep.subr.mxu0 0.0
    %1156 = vmatpush1.msra.mxu0 0.0
    %1157 = vmatprep.subr.mxu0 0.0
    %1158 = vmatpush1.msra.mxu0 0.0
    %1159 = vmatprep.mubr.f32.mxu0 0.0
    %1160 = vmatmul.mubr.f32.gmra.mrb[0].mxu0 %v1093
    %v1161 = vpop.f32.mrb[0].mxu0
    %v1162 = vadd.f32 0.0, %v1161
    %v1163 = vpop.f32.mrb[0].mxu0
    %1164 = vdwg.mxu0
    %v1166 = vsel %vm338, %v1008, 0
    %1168 = vmatprep.subr.mxu0 0.0
    %1169 = vmatpush1.msra.mxu0 %v309
    %1170 = vmatprep.subr.mxu0 0.0
    %1171 = vmatpush1.msra.mxu0 0.0
    %1172 = vmatprep.subr.mxu0 0.0
    %1173 = vmatpush1.msra.mxu0 0.0
    %1174 = vmatprep.subr.mxu0 0.0
    %1175 = vmatpush1.msra.mxu0 0.0
    %1176 = vmatprep.subr.mxu0 0.0
    %1177 = vmatpush1.msra.mxu0 0.0
    %1178 = vmatprep.subr.mxu0 0.0
    %1179 = vmatpush1.msra.mxu0 0.0
    %1180 = vmatprep.subr.mxu0 0.0
    %1181 = vmatpush1.msra.mxu0 0.0
    %1182 = vmatprep.subr.mxu0 0.0
    %1183 = vmatpush1.msra.mxu0 0.0
    %1184 = vmatprep.subr.mxu0 0.0
    %1185 = vmatpush1.msra.mxu0 0.0
    %1186 = vmatprep.subr.mxu0 0.0
    %1187 = vmatpush1.msra.mxu0 0.0
    %1188 = vmatprep.subr.mxu0 0.0
    %1189 = vmatpush1.msra.mxu0 0.0
    %1190 = vmatprep.subr.mxu0 0.0
    %1191 = vmatpush1.msra.mxu0 0.0
    %1192 = vmatprep.subr.mxu0 0.0
    %1193 = vmatpush1.msra.mxu0 0.0
    %1194 = vmatprep.subr.mxu0 0.0
    %1195 = vmatpush1.msra.mxu0 0.0
    %1196 = vmatprep.subr.mxu0 0.0
    %1197 = vmatpush1.msra.mxu0 0.0
    %1198 = vmatprep.subr.mxu0 0.0
    %1199 = vmatpush1.msra.mxu0 0.0
    %1200 = vmatprep.subr.mxu0 0.0
    %1201 = vmatpush1.msra.mxu0 0.0
    %1202 = vmatprep.subr.mxu0 0.0
    %1203 = vmatpush1.msra.mxu0 0.0
    %1204 = vmatprep.subr.mxu0 0.0
    %1205 = vmatpush1.msra.mxu0 0.0
    %1206 = vmatprep.subr.mxu0 0.0
    %1207 = vmatpush1.msra.mxu0 0.0
    %1208 = vmatprep.subr.mxu0 0.0
    %1209 = vmatpush1.msra.mxu0 0.0
    %1210 = vmatprep.subr.mxu0 0.0
    %1211 = vmatpush1.msra.mxu0 0.0
    %1212 = vmatprep.subr.mxu0 0.0
    %1213 = vmatpush1.msra.mxu0 0.0
    %1214 = vmatprep.subr.mxu0 0.0
    %1215 = vmatpush1.msra.mxu0 0.0
    %1216 = vmatprep.subr.mxu0 0.0
    %1217 = vmatpush1.msra.mxu0 0.0
    %1218 = vmatprep.subr.mxu0 0.0
    %1219 = vmatpush1.msra.mxu0 0.0
    %1220 = vmatprep.subr.mxu0 0.0
    %1221 = vmatpush1.msra.mxu0 0.0
    %1222 = vmatprep.subr.mxu0 0.0
    %1223 = vmatpush1.msra.mxu0 0.0
    %1224 = vmatprep.subr.mxu0 0.0
    %1225 = vmatpush1.msra.mxu0 0.0
    %1226 = vmatprep.subr.mxu0 0.0
    %1227 = vmatpush1.msra.mxu0 0.0
    %1228 = vmatprep.subr.mxu0 0.0
    %1229 = vmatpush1.msra.mxu0 0.0
    %1230 = vmatprep.subr.mxu0 0.0
    %1231 = vmatpush1.msra.mxu0 0.0
    %1232 = vmatprep.mubr.f32.mxu0 0.0
    %1233 = vmatmul.mubr.f32.gmra.mrb[0].mxu0 %v1166
    %v1234 = vpop.f32.mrb[0].mxu0
    %v1235 = vadd.f32 0.0, %v1234
    %v1236 = vpop.f32.mrb[0].mxu0
    %1237 = vdwg.mxu0
    %v1239 = vsel %vm338, %v1010, 0
    %1241 = vmatprep.subr.mxu0 0.0
    %1242 = vmatpush1.msra.mxu0 %v311
    %1243 = vmatprep.subr.mxu0 0.0
    %1244 = vmatpush1.msra.mxu0 0.0
    %1245 = vmatprep.subr.mxu0 0.0
    %1246 = vmatpush1.msra.mxu0 0.0
    %1247 = vmatprep.subr.mxu0 0.0
    %1248 = vmatpush1.msra.mxu0 0.0
    %1249 = vmatprep.subr.mxu0 0.0
    %1250 = vmatpush1.msra.mxu0 0.0
    %1251 = vmatprep.subr.mxu0 0.0
    %1252 = vmatpush1.msra.mxu0 0.0
    %1253 = vmatprep.subr.mxu0 0.0
    %1254 = vmatpush1.msra.mxu0 0.0
    %1255 = vmatprep.subr.mxu0 0.0
    %1256 = vmatpush1.msra.mxu0 0.0
    %1257 = vmatprep.subr.mxu0 0.0
    %1258 = vmatpush1.msra.mxu0 0.0
    %1259 = vmatprep.subr.mxu0 0.0
    %1260 = vmatpush1.msra.mxu0 0.0
    %1261 = vmatprep.subr.mxu0 0.0
    %1262 = vmatpush1.msra.mxu0 0.0
    %1263 = vmatprep.subr.mxu0 0.0
    %1264 = vmatpush1.msra.mxu0 0.0
    %1265 = vmatprep.subr.mxu0 0.0
    %1266 = vmatpush1.msra.mxu0 0.0
    %1267 = vmatprep.subr.mxu0 0.0
    %1268 = vmatpush1.msra.mxu0 0.0
    %1269 = vmatprep.subr.mxu0 0.0
    %1270 = vmatpush1.msra.mxu0 0.0
    %1271 = vmatprep.subr.mxu0 0.0
    %1272 = vmatpush1.msra.mxu0 0.0
    %1273 = vmatprep.subr.mxu0 0.0
    %1274 = vmatpush1.msra.mxu0 0.0
    %1275 = vmatprep.subr.mxu0 0.0
    %1276 = vmatpush1.msra.mxu0 0.0
    %1277 = vmatprep.subr.mxu0 0.0
    %1278 = vmatpush1.msra.mxu0 0.0
    %1279 = vmatprep.subr.mxu0 0.0
    %1280 = vmatpush1.msra.mxu0 0.0
    %1281 = vmatprep.subr.mxu0 0.0
    %1282 = vmatpush1.msra.mxu0 0.0
    %1283 = vmatprep.subr.mxu0 0.0
    %1284 = vmatpush1.msra.mxu0 0.0
    %1285 = vmatprep.subr.mxu0 0.0
    %1286 = vmatpush1.msra.mxu0 0.0
    %1287 = vmatprep.subr.mxu0 0.0
    %1288 = vmatpush1.msra.mxu0 0.0
    %1289 = vmatprep.subr.mxu0 0.0
    %1290 = vmatpush1.msra.mxu0 0.0
    %1291 = vmatprep.subr.mxu0 0.0
    %1292 = vmatpush1.msra.mxu0 0.0
    %1293 = vmatprep.subr.mxu0 0.0
    %1294 = vmatpush1.msra.mxu0 0.0
    %1295 = vmatprep.subr.mxu0 0.0
    %1296 = vmatpush1.msra.mxu0 0.0
    %1297 = vmatprep.subr.mxu0 0.0
    %1298 = vmatpush1.msra.mxu0 0.0
    %1299 = vmatprep.subr.mxu0 0.0
    %1300 = vmatpush1.msra.mxu0 0.0
    %1301 = vmatprep.subr.mxu0 0.0
    %1302 = vmatpush1.msra.mxu0 0.0
    %1303 = vmatprep.subr.mxu0 0.0
    %1304 = vmatpush1.msra.mxu0 0.0
    %1305 = vmatprep.mubr.f32.mxu0 0.0
    %1306 = vmatmul.mubr.f32.gmra.mrb[0].mxu0 %v1239
    %v1307 = vpop.f32.mrb[0].mxu0
    %v1308 = vadd.f32 0.0, %v1307
    %v1309 = vpop.f32.mrb[0].mxu0
    %1310 = vdwg.mxu0
    %v1312 = vsel %vm338, %v1012, 0
    %1314 = vmatprep.subr.mxu0 0.0
    %1315 = vmatpush1.msra.mxu0 %v315
    %1316 = vmatprep.subr.mxu0 0.0
    %1317 = vmatpush1.msra.mxu0 0.0
    %1318 = vmatprep.subr.mxu0 0.0
    %1319 = vmatpush1.msra.mxu0 0.0
    %1320 = vmatprep.subr.mxu0 0.0
    %1321 = vmatpush1.msra.mxu0 0.0
    %1322 = vmatprep.subr.mxu0 0.0
    %1323 = vmatpush1.msra.mxu0 0.0
    %1324 = vmatprep.subr.mxu0 0.0
    %1325 = vmatpush1.msra.mxu0 0.0
    %1326 = vmatprep.subr.mxu0 0.0
    %1327 = vmatpush1.msra.mxu0 0.0
    %1328 = vmatprep.subr.mxu0 0.0
    %1329 = vmatpush1.msra.mxu0 0.0
    %1330 = vmatprep.subr.mxu0 0.0
    %1331 = vmatpush1.msra.mxu0 0.0
    %1332 = vmatprep.subr.mxu0 0.0
    %1333 = vmatpush1.msra.mxu0 0.0
    %1334 = vmatprep.subr.mxu0 0.0
    %1335 = vmatpush1.msra.mxu0 0.0
    %1336 = vmatprep.subr.mxu0 0.0
    %1337 = vmatpush1.msra.mxu0 0.0
    %1338 = vmatprep.subr.mxu0 0.0
    %1339 = vmatpush1.msra.mxu0 0.0
    %1340 = vmatprep.subr.mxu0 0.0
    %1341 = vmatpush1.msra.mxu0 0.0
    %1342 = vmatprep.subr.mxu0 0.0
    %1343 = vmatpush1.msra.mxu0 0.0
    %1344 = vmatprep.subr.mxu0 0.0
    %1345 = vmatpush1.msra.mxu0 0.0
    %1346 = vmatprep.subr.mxu0 0.0
    %1347 = vmatpush1.msra.mxu0 0.0
    %1348 = vmatprep.subr.mxu0 0.0
    %1349 = vmatpush1.msra.mxu0 0.0
    %1350 = vmatprep.subr.mxu0 0.0
    %1351 = vmatpush1.msra.mxu0 0.0
    %1352 = vmatprep.subr.mxu0 0.0
    %1353 = vmatpush1.msra.mxu0 0.0
    %1354 = vmatprep.subr.mxu0 0.0
    %1355 = vmatpush1.msra.mxu0 0.0
    %1356 = vmatprep.subr.mxu0 0.0
    %1357 = vmatpush1.msra.mxu0 0.0
    %1358 = vmatprep.subr.mxu0 0.0
    %1359 = vmatpush1.msra.mxu0 0.0
    %1360 = vmatprep.subr.mxu0 0.0
    %1361 = vmatpush1.msra.mxu0 0.0
    %1362 = vmatprep.subr.mxu0 0.0
    %1363 = vmatpush1.msra.mxu0 0.0
    %1364 = vmatprep.subr.mxu0 0.0
    %1365 = vmatpush1.msra.mxu0 0.0
    %1366 = vmatprep.subr.mxu0 0.0
    %1367 = vmatpush1.msra.mxu0 0.0
    %1368 = vmatprep.subr.mxu0 0.0
    %1369 = vmatpush1.msra.mxu0 0.0
    %1370 = vmatprep.subr.mxu0 0.0
    %1371 = vmatpush1.msra.mxu0 0.0
    %1372 = vmatprep.subr.mxu0 0.0
    %1373 = vmatpush1.msra.mxu0 0.0
    %1374 = vmatprep.subr.mxu0 0.0
    %1375 = vmatpush1.msra.mxu0 0.0
    %1376 = vmatprep.subr.mxu0 0.0
    %1377 = vmatpush1.msra.mxu0 0.0
    %1378 = vmatprep.mubr.f32.mxu0 0.0
    %1379 = vmatmul.mubr.f32.gmra.mrb[0].mxu0 %v1312
    %v1380 = vpop.f32.mrb[0].mxu0
    %v1381 = vadd.f32 0.0, %v1380
    %v1382 = vpop.f32.mrb[0].mxu0
    %1383 = vdwg.mxu0
    %v1385 = vsel %vm338, %v1014, 0
    %1387 = vmatprep.subr.mxu0 0.0
    %1388 = vmatpush1.msra.mxu0 %v317
    %1389 = vmatprep.subr.mxu0 0.0
    %1390 = vmatpush1.msra.mxu0 0.0
    %1391 = vmatprep.subr.mxu0 0.0
    %1392 = vmatpush1.msra.mxu0 0.0
    %1393 = vmatprep.subr.mxu0 0.0
    %1394 = vmatpush1.msra.mxu0 0.0
    %1395 = vmatprep.subr.mxu0 0.0
    %1396 = vmatpush1.msra.mxu0 0.0
    %1397 = vmatprep.subr.mxu0 0.0
    %1398 = vmatpush1.msra.mxu0 0.0
    %1399 = vmatprep.subr.mxu0 0.0
    %1400 = vmatpush1.msra.mxu0 0.0
    %1401 = vmatprep.subr.mxu0 0.0
    %1402 = vmatpush1.msra.mxu0 0.0
    %1403 = vmatprep.subr.mxu0 0.0
    %1404 = vmatpush1.msra.mxu0 0.0
    %1405 = vmatprep.subr.mxu0 0.0
    %1406 = vmatpush1.msra.mxu0 0.0
    %1407 = vmatprep.subr.mxu0 0.0
    %1408 = vmatpush1.msra.mxu0 0.0
    %1409 = vmatprep.subr.mxu0 0.0
    %1410 = vmatpush1.msra.mxu0 0.0
    %1411 = vmatprep.subr.mxu0 0.0
    %1412 = vmatpush1.msra.mxu0 0.0
    %1413 = vmatprep.subr.mxu0 0.0
    %1414 = vmatpush1.msra.mxu0 0.0
    %1415 = vmatprep.subr.mxu0 0.0
    %1416 = vmatpush1.msra.mxu0 0.0
    %1417 = vmatprep.subr.mxu0 0.0
    %1418 = vmatpush1.msra.mxu0 0.0
    %1419 = vmatprep.subr.mxu0 0.0
    %1420 = vmatpush1.msra.mxu0 0.0
    %1421 = vmatprep.subr.mxu0 0.0
    %1422 = vmatpush1.msra.mxu0 0.0
    %1423 = vmatprep.subr.mxu0 0.0
    %1424 = vmatpush1.msra.mxu0 0.0
    %1425 = vmatprep.subr.mxu0 0.0
    %1426 = vmatpush1.msra.mxu0 0.0
    %1427 = vmatprep.subr.mxu0 0.0
    %1428 = vmatpush1.msra.mxu0 0.0
    %1429 = vmatprep.subr.mxu0 0.0
    %1430 = vmatpush1.msra.mxu0 0.0
    %1431 = vmatprep.subr.mxu0 0.0
    %1432 = vmatpush1.msra.mxu0 0.0
    %1433 = vmatprep.subr.mxu0 0.0
    %1434 = vmatpush1.msra.mxu0 0.0
    %1435 = vmatprep.subr.mxu0 0.0
    %1436 = vmatpush1.msra.mxu0 0.0
    %1437 = vmatprep.subr.mxu0 0.0
    %1438 = vmatpush1.msra.mxu0 0.0
    %1439 = vmatprep.subr.mxu0 0.0
    %1440 = vmatpush1.msra.mxu0 0.0
    %1441 = vmatprep.subr.mxu0 0.0
    %1442 = vmatpush1.msra.mxu0 0.0
    %1443 = vmatprep.subr.mxu0 0.0
    %1444 = vmatpush1.msra.mxu0 0.0
    %1445 = vmatprep.subr.mxu0 0.0
    %1446 = vmatpush1.msra.mxu0 0.0
    %1447 = vmatprep.subr.mxu0 0.0
    %1448 = vmatpush1.msra.mxu0 0.0
    %1449 = vmatprep.subr.mxu0 0.0
    %1450 = vmatpush1.msra.mxu0 0.0
    %1451 = vmatprep.mubr.f32.mxu0 0.0
    %1452 = vmatmul.mubr.f32.gmra.mrb[0].mxu0 %v1385
    %v1453 = vpop.f32.mrb[0].mxu0
    %v1454 = vadd.f32 0.0, %v1453
    %v1455 = vpop.f32.mrb[0].mxu0
    %1456 = vdwg.mxu0
    %v1458 = vsel %vm338, %v1016, 0
    %1460 = vmatprep.subr.mxu0 0.0
    %1461 = vmatpush1.msra.mxu0 %v321
    %1462 = vmatprep.subr.mxu0 0.0
    %1463 = vmatpush1.msra.mxu0 0.0
    %1464 = vmatprep.subr.mxu0 0.0
    %1465 = vmatpush1.msra.mxu0 0.0
    %1466 = vmatprep.subr.mxu0 0.0
    %1467 = vmatpush1.msra.mxu0 0.0
    %1468 = vmatprep.subr.mxu0 0.0
    %1469 = vmatpush1.msra.mxu0 0.0
    %1470 = vmatprep.subr.mxu0 0.0
    %1471 = vmatpush1.msra.mxu0 0.0
    %1472 = vmatprep.subr.mxu0 0.0
    %1473 = vmatpush1.msra.mxu0 0.0
    %1474 = vmatprep.subr.mxu0 0.0
    %1475 = vmatpush1.msra.mxu0 0.0
    %1476 = vmatprep.subr.mxu0 0.0
    %1477 = vmatpush1.msra.mxu0 0.0
    %1478 = vmatprep.subr.mxu0 0.0
    %1479 = vmatpush1.msra.mxu0 0.0
    %1480 = vmatprep.subr.mxu0 0.0
    %1481 = vmatpush1.msra.mxu0 0.0
    %1482 = vmatprep.subr.mxu0 0.0
    %1483 = vmatpush1.msra.mxu0 0.0
    %1484 = vmatprep.subr.mxu0 0.0
    %1485 = vmatpush1.msra.mxu0 0.0
    %1486 = vmatprep.subr.mxu0 0.0
    %1487 = vmatpush1.msra.mxu0 0.0
    %1488 = vmatprep.subr.mxu0 0.0
    %1489 = vmatpush1.msra.mxu0 0.0
    %1490 = vmatprep.subr.mxu0 0.0
    %1491 = vmatpush1.msra.mxu0 0.0
    %1492 = vmatprep.subr.mxu0 0.0
    %1493 = vmatpush1.msra.mxu0 0.0
    %1494 = vmatprep.subr.mxu0 0.0
    %1495 = vmatpush1.msra.mxu0 0.0
    %1496 = vmatprep.subr.mxu0 0.0
    %1497 = vmatpush1.msra.mxu0 0.0
    %1498 = vmatprep.subr.mxu0 0.0
    %1499 = vmatpush1.msra.mxu0 0.0
    %1500 = vmatprep.subr.mxu0 0.0
    %1501 = vmatpush1.msra.mxu0 0.0
    %1502 = vmatprep.subr.mxu0 0.0
    %1503 = vmatpush1.msra.mxu0 0.0
    %1504 = vmatprep.subr.mxu0 0.0
    %1505 = vmatpush1.msra.mxu0 0.0
    %1506 = vmatprep.subr.mxu0 0.0
    %1507 = vmatpush1.msra.mxu0 0.0
    %1508 = vmatprep.subr.mxu0 0.0
    %1509 = vmatpush1.msra.mxu0 0.0
    %1510 = vmatprep.subr.mxu0 0.0
    %1511 = vmatpush1.msra.mxu0 0.0
    %1512 = vmatprep.subr.mxu0 0.0
    %1513 = vmatpush1.msra.mxu0 0.0
    %1514 = vmatprep.subr.mxu0 0.0
    %1515 = vmatpush1.msra.mxu0 0.0
    %1516 = vmatprep.subr.mxu0 0.0
    %1517 = vmatpush1.msra.mxu0 0.0
    %1518 = vmatprep.subr.mxu0 0.0
    %1519 = vmatpush1.msra.mxu0 0.0
    %1520 = vmatprep.subr.mxu0 0.0
    %1521 = vmatpush1.msra.mxu0 0.0
    %1522 = vmatprep.subr.mxu0 0.0
    %1523 = vmatpush1.msra.mxu0 0.0
    %1524 = vmatprep.mubr.f32.mxu0 0.0
    %1525 = vmatmul.mubr.f32.gmra.mrb[0].mxu0 %v1458
    %v1526 = vpop.f32.mrb[0].mxu0
    %v1527 = vadd.f32 0.0, %v1526
    %v1528 = vpop.f32.mrb[0].mxu0
    %1529 = vdwg.mxu0
    %v1531 = vsel %vm338, %v1018, 0
    %1533 = vmatprep.subr.mxu0 0.0
    %1534 = vmatpush1.msra.mxu0 %v323
    %1535 = vmatprep.subr.mxu0 0.0
    %1536 = vmatpush1.msra.mxu0 0.0
    %1537 = vmatprep.subr.mxu0 0.0
    %1538 = vmatpush1.msra.mxu0 0.0
    %1539 = vmatprep.subr.mxu0 0.0
    %1540 = vmatpush1.msra.mxu0 0.0
    %1541 = vmatprep.subr.mxu0 0.0
    %1542 = vmatpush1.msra.mxu0 0.0
    %1543 = vmatprep.subr.mxu0 0.0
    %1544 = vmatpush1.msra.mxu0 0.0
    %1545 = vmatprep.subr.mxu0 0.0
    %1546 = vmatpush1.msra.mxu0 0.0
    %1547 = vmatprep.subr.mxu0 0.0
    %1548 = vmatpush1.msra.mxu0 0.0
    %1549 = vmatprep.subr.mxu0 0.0
    %1550 = vmatpush1.msra.mxu0 0.0
    %1551 = vmatprep.subr.mxu0 0.0
    %1552 = vmatpush1.msra.mxu0 0.0
    %1553 = vmatprep.subr.mxu0 0.0
    %1554 = vmatpush1.msra.mxu0 0.0
    %1555 = vmatprep.subr.mxu0 0.0
    %1556 = vmatpush1.msra.mxu0 0.0
    %1557 = vmatprep.subr.mxu0 0.0
    %1558 = vmatpush1.msra.mxu0 0.0
    %1559 = vmatprep.subr.mxu0 0.0
    %1560 = vmatpush1.msra.mxu0 0.0
    %1561 = vmatprep.subr.mxu0 0.0
    %1562 = vmatpush1.msra.mxu0 0.0
    %1563 = vmatprep.subr.mxu0 0.0
    %1564 = vmatpush1.msra.mxu0 0.0
    %1565 = vmatprep.subr.mxu0 0.0
    %1566 = vmatpush1.msra.mxu0 0.0
    %1567 = vmatprep.subr.mxu0 0.0
    %1568 = vmatpush1.msra.mxu0 0.0
    %1569 = vmatprep.subr.mxu0 0.0
    %1570 = vmatpush1.msra.mxu0 0.0
    %1571 = vmatprep.subr.mxu0 0.0
    %1572 = vmatpush1.msra.mxu0 0.0
    %1573 = vmatprep.subr.mxu0 0.0
    %1574 = vmatpush1.msra.mxu0 0.0
    %1575 = vmatprep.subr.mxu0 0.0
    %1576 = vmatpush1.msra.mxu0 0.0
    %1577 = vmatprep.subr.mxu0 0.0
    %1578 = vmatpush1.msra.mxu0 0.0
    %1579 = vmatprep.subr.mxu0 0.0
    %1580 = vmatpush1.msra.mxu0 0.0
    %1581 = vmatprep.subr.mxu0 0.0
    %1582 = vmatpush1.msra.mxu0 0.0
    %1583 = vmatprep.subr.mxu0 0.0
    %1584 = vmatpush1.msra.mxu0 0.0
    %1585 = vmatprep.subr.mxu0 0.0
    %1586 = vmatpush1.msra.mxu0 0.0
    %1587 = vmatprep.subr.mxu0 0.0
    %1588 = vmatpush1.msra.mxu0 0.0
    %1589 = vmatprep.subr.mxu0 0.0
    %1590 = vmatpush1.msra.mxu0 0.0
    %1591 = vmatprep.subr.mxu0 0.0
    %1592 = vmatpush1.msra.mxu0 0.0
    %1593 = vmatprep.subr.mxu0 0.0
    %1594 = vmatpush1.msra.mxu0 0.0
    %1595 = vmatprep.subr.mxu0 0.0
    %1596 = vmatpush1.msra.mxu0 0.0
    %1597 = vmatprep.mubr.f32.mxu0 0.0
    %1598 = vmatmul.mubr.f32.gmra.mrb[0].mxu0 %v1531
    %v1599 = vpop.f32.mrb[0].mxu0
    %v1600 = vadd.f32 0.0, %v1599
    %v1601 = vpop.f32.mrb[0].mxu0
    %1602 = vdwg.mxu0
    %1605 = vrot.lane.b32.xlu0 %v1235, 8
    %v1606 = vpop.permute.xlu0 %1605
    %1607 = vrot.lane.b32.xlu0 %v1308, 8
    %v1608 = vpop.permute.xlu0 %1607
    %1613 = vrot.lane.b32.xlu0 %v1381, 16
    %v1614 = vpop.permute.xlu0 %1613
    %1615 = vrot.lane.b32.xlu0 %v1454, 16
    %v1616 = vpop.permute.xlu0 %1615
    %1621 = vrot.lane.b32.xlu0 %v1527, 24
    %v1622 = vpop.permute.xlu0 %1621
    %1623 = vrot.lane.b32.xlu0 %v1600, 24
    %v1624 = vpop.permute.xlu0 %1623
    %v1627 = vsel %vm338, %v1089, %v1606
    %v1628 = vsel %vm338, %v1162, %v1608
    %vm1629 = vcmask 130048
    %v1630 = vsel %vm1629, %v1627, %v1614
    %v1631 = vsel %vm1629, %v1628, %v1616
    %vm1632 = vcmask 195584
    %v1633 = vsel %vm1632, %v1630, %v1622
    %v1634 = vsel %vm1632, %v1631, %v1624
    %v1635 = vld [vmem:[%s1 + $0x60] sm:$0xff]
    %v1636 = vld [vmem:[%s1 + $0x68] sm:$0xff]
    %v1637 = vld [vmem:[%s1 + $0x70] sm:$0xff]
    %v1638 = vld [vmem:[%s1 + $0x78] sm:$0xff]
    %v1639 = vlaneseq
    %v1640 = vshrl.u32 %v1639, 7
    %v1641 = vsub.s32 3, %v1640
    %v1642 = vrot.slane %v20, %v1641
    %v1644 = vsel %vm30, %v1633, 0
    %v1647 = vsel %vm30, %v1634, 0
    %1649 = vmatprep.subr.mxu0 0.0
    %1650 = vmatpush1.msra.mxu0 %v1635
    %1651 = vmatprep.subr.mxu0 0.0
    %1652 = vmatpush1.msra.mxu0 %v1636
    %1653 = vmatprep.subr.mxu0 0.0
    %1654 = vmatpush1.msra.mxu0 %v1637
    %1655 = vmatprep.subr.mxu0 0.0
    %1656 = vmatpush1.msra.mxu0 %v1638
    %1657 = vmatprep.subr.mxu0 0.0
    %1658 = vmatpush1.msra.mxu0 0.0
    %1659 = vmatprep.subr.mxu0 0.0
    %1660 = vmatpush1.msra.mxu0 0.0
    %1661 = vmatprep.subr.mxu0 0.0
    %1662 = vmatpush1.msra.mxu0 0.0
    %1663 = vmatprep.subr.mxu0 0.0
    %1664 = vmatpush1.msra.mxu0 0.0
    %1665 = vmatprep.subr.mxu0 0.0
    %1666 = vmatpush1.msra.mxu0 0.0
    %1667 = vmatprep.subr.mxu0 0.0
    %1668 = vmatpush1.msra.mxu0 0.0
    %1669 = vmatprep.subr.mxu0 0.0
    %1670 = vmatpush1.msra.mxu0 0.0
    %1671 = vmatprep.subr.mxu0 0.0
    %1672 = vmatpush1.msra.mxu0 0.0
    %1673 = vmatprep.subr.mxu0 0.0
    %1674 = vmatpush1.msra.mxu0 0.0
    %1675 = vmatprep.subr.mxu0 0.0
    %1676 = vmatpush1.msra.mxu0 0.0
    %1677 = vmatprep.subr.mxu0 0.0
    %1678 = vmatpush1.msra.mxu0 0.0
    %1679 = vmatprep.subr.mxu0 0.0
    %1680 = vmatpush1.msra.mxu0 0.0
    %1681 = vmatprep.subr.mxu0 0.0
    %1682 = vmatpush1.msra.mxu0 0.0
    %1683 = vmatprep.subr.mxu0 0.0
    %1684 = vmatpush1.msra.mxu0 0.0
    %1685 = vmatprep.subr.mxu0 0.0
    %1686 = vmatpush1.msra.mxu0 0.0
    %1687 = vmatprep.subr.mxu0 0.0
    %1688 = vmatpush1.msra.mxu0 0.0
    %1689 = vmatprep.subr.mxu0 0.0
    %1690 = vmatpush1.msra.mxu0 0.0
    %1691 = vmatprep.subr.mxu0 0.0
    %1692 = vmatpush1.msra.mxu0 0.0
    %1693 = vmatprep.subr.mxu0 0.0
    %1694 = vmatpush1.msra.mxu0 0.0
    %1695 = vmatprep.subr.mxu0 0.0
    %1696 = vmatpush1.msra.mxu0 0.0
    %1697 = vmatprep.subr.mxu0 0.0
    %1698 = vmatpush1.msra.mxu0 0.0
    %1699 = vmatprep.subr.mxu0 0.0
    %1700 = vmatpush1.msra.mxu0 0.0
    %1701 = vmatprep.subr.mxu0 0.0
    %1702 = vmatpush1.msra.mxu0 0.0
    %1703 = vmatprep.subr.mxu0 0.0
    %1704 = vmatpush1.msra.mxu0 0.0
    %1705 = vmatprep.subr.mxu0 0.0
    %1706 = vmatpush1.msra.mxu0 0.0
    %1707 = vmatprep.subr.mxu0 0.0
    %1708 = vmatpush1.msra.mxu0 0.0
    %1709 = vmatprep.subr.mxu0 0.0
    %1710 = vmatpush1.msra.mxu0 0.0
    %1711 = vmatprep.subr.mxu0 0.0
    %1712 = vmatpush1.msra.mxu0 0.0
    %1713 = vmatprep.mubr.f32.mxu0 0.0
    %1714 = vmatmul.mubr.f32.gmra.mrb[0].mxu0 %v1644
    %v1715 = vpop.f32.mrb[0].mxu0
    %v1716 = vadd.f32 %v1642, %v1715
    %v1717 = vpop.f32.mrb[0].mxu0
    %1718 = vmatprep.mubr.f32.mxu0 0.0
    %1719 = vmatmul.mubr.f32.gmra.mrb[0].mxu0 %v1647
    %v1720 = vpop.f32.mrb[0].mxu0
    %v1721 = vadd.f32 %v1642, %v1720
    %v1722 = vpop.f32.mrb[0].mxu0
    %1723 = vdwg.mxu0
    %v1724 = vadd.f32 %v18, %v1716
    %v1725 = vadd.f32 %v19, %v1721
    %v1726 = vsel %vm30, %v1724, 0.0
    %1727 = vadd.xlane.f32.xlu0 %v1726
    %v1728 = vpop.xlane.xlu0 %1727
    %v1729 = vsel %vm30, %v1725, 0.0
    %1730 = vadd.xlane.f32.xlu0 %v1729
    %v1731 = vpop.xlane.xlu0 %1730
    %v1732 = vrcp.pop 32.0
    %v1733 = vmul.f32 %v1728, %v1732
    %v1734 = vmul.f32 %v1731, %v1732
    %v1735 = vsub.f32 %v1724, %v1733
    %v1736 = vsub.f32 %v1725, %v1734
    %v1737 = vmul.f32 %v1735, %v1735
    %v1738 = vmul.f32 %v1736, %v1736
    %v1739 = vsel %vm30, %v1737, 0.0
    %1740 = vadd.xlane.f32.xlu0 %v1739
    %v1741 = vpop.xlane.xlu0 %1740
    %v1742 = vsel %vm30, %v1738, 0.0
    %1743 = vadd.xlane.f32.xlu0 %v1742
    %v1744 = vpop.xlane.xlu0 %1743
    %v1745 = vmul.f32 %v1741, %v1732
    %v1746 = vmul.f32 %v1744, %v1732
    %v1747 = vadd.f32 %v1745, 1e-05
    %v1748 = vadd.f32 %v1746, 1e-05
    %v1749 = vrsqrt.pop %v1747
    %v1750 = vrsqrt.pop %v1748
    %v1751 = vmul.f32 %v1735, %v1749
    %v1752 = vmul.f32 %v1736, %v1750
    %v1753 = vlaneseq
    %v1754 = vshrl.u32 %v1753, 7
    %v1755 = vsub.s32 4, %v1754
    %v1756 = vrot.slane %v20, %v1755
    %v1757 = vmul.f32 %v1751, %v1756
    %v1758 = vmul.f32 %v1752, %v1756
    %v1759 = vlaneseq
    %v1760 = vshrl.u32 %v1759, 7
    %v1761 = vsub.s32 5, %v1760
    %v1762 = vrot.slane %v20, %v1761
    %v1763 = vadd.f32 %v1757, %v1762
    %v1764 = vadd.f32 %v1758, %v1762
    %v1765 = vld [vmem:[%s2] sm:$0xff]
    %v1766 = vld [vmem:[%s2 + $0x8] sm:$0xff]
    %v1767 = vld [vmem:[%s2 + $0x10] sm:$0xff]
    %v1768 = vld [vmem:[%s2 + $0x18] sm:$0xff]
    %v1769 = vld [vmem:[%s2 + $0x20] sm:$0x1]
    %v1770 = vlaneseq
    %v1771 = vshrl.u32 %v1770, 7
    %v1772 = vsub.s32 0, %v1771
    %v1773 = vrot.slane %v1769, %v1772
    %v1775 = vsel %vm30, %v1763, 0
    %v1778 = vsel %vm30, %v1764, 0
    %1780 = vmatprep.subr.mxu0 0.0
    %1781 = vmatpush1.msra.mxu0 %v1765
    %1782 = vmatprep.subr.mxu0 0.0
    %1783 = vmatpush1.msra.mxu0 %v1766
    %1784 = vmatprep.subr.mxu0 0.0
    %1785 = vmatpush1.msra.mxu0 %v1767
    %1786 = vmatprep.subr.mxu0 0.0
    %1787 = vmatpush1.msra.mxu0 %v1768
    %1788 = vmatprep.subr.mxu0 0.0
    %1789 = vmatpush1.msra.mxu0 0.0
    %1790 = vmatprep.subr.mxu0 0.0
    %1791 = vmatpush1.msra.mxu0 0.0
    %1792 = vmatprep.subr.mxu0 0.0
    %1793 = vmatpush1.msra.mxu0 0.0
    %1794 = vmatprep.subr.mxu0 0.0
    %1795 = vmatpush1.msra.mxu0 0.0
    %1796 = vmatprep.subr.mxu0 0.0
    %1797 = vmatpush1.msra.mxu0 0.0
    %1798 = vmatprep.subr.mxu0 0.0
    %1799 = vmatpush1.msra.mxu0 0.0
    %1800 = vmatprep.subr.mxu0 0.0
    %1801 = vmatpush1.msra.mxu0 0.0
    %1802 = vmatprep.subr.mxu0 0.0
    %1803 = vmatpush1.msra.mxu0 0.0
    %1804 = vmatprep.subr.mxu0 0.0
    %1805 = vmatpush1.msra.mxu0 0.0
    %1806 = vmatprep.subr.mxu0 0.0
    %1807 = vmatpush1.msra.mxu0 0.0
    %1808 = vmatprep.subr.mxu0 0.0
    %1809 = vmatpush1.msra.mxu0 0.0
    %1810 = vmatprep.subr.mxu0 0.0
    %1811 = vmatpush1.msra.mxu0 0.0
    %1812 = vmatprep.subr.mxu0 0.0
    %1813 = vmatpush1.msra.mxu0 0.0
    %1814 = vmatprep.subr.mxu0 0.0
    %1815 = vmatpush1.msra.mxu0 0.0
    %1816 = vmatprep.subr.mxu0 0.0
    %1817 = vmatpush1.msra.mxu0 0.0
    %1818 = vmatprep.subr.mxu0 0.0
    %1819 = vmatpush1.msra.mxu0 0.0
    %1820 = vmatprep.subr.mxu0 0.0
    %1821 = vmatpush1.msra.mxu0 0.0
    %1822 = vmatprep.subr.mxu0 0.0
    %1823 = vmatpush1.msra.mxu0 0.0
    %1824 = vmatprep.subr.mxu0 0.0
    %1825 = vmatpush1.msra.mxu0 0.0
    %1826 = vmatprep.subr.mxu0 0.0
    %1827 = vmatpush1.msra.mxu0 0.0
    %1828 = vmatprep.subr.mxu0 0.0
    %1829 = vmatpush1.msra.mxu0 0.0
    %1830 = vmatprep.subr.mxu0 0.0
    %1831 = vmatpush1.msra.mxu0 0.0
    %1832 = vmatprep.subr.mxu0 0.0
    %1833 = vmatpush1.msra.mxu0 0.0
    %1834 = vmatprep.subr.mxu0 0.0
    %1835 = vmatpush1.msra.mxu0 0.0
    %1836 = vmatprep.subr.mxu0 0.0
    %1837 = vmatpush1.msra.mxu0 0.0
    %1838 = vmatprep.subr.mxu0 0.0
    %1839 = vmatpush1.msra.mxu0 0.0
    %1840 = vmatprep.subr.mxu0 0.0
    %1841 = vmatpush1.msra.mxu0 0.0
    %1842 = vmatprep.subr.mxu0 0.0
    %1843 = vmatpush1.msra.mxu0 0.0
    %1844 = vmatprep.mubr.f32.mxu0 0.0
    %1845 = vmatmul.mubr.f32.gmra.mrb[0].mxu0 %v1775
    %v1846 = vpop.f32.mrb[0].mxu0
    %v1847 = vadd.f32 %v1773, %v1846
    %v1848 = vpop.f32.mrb[0].mxu0
    %1849 = vmatprep.mubr.f32.mxu0 0.0
    %1850 = vmatmul.mubr.f32.gmra.mrb[0].mxu0 %v1778
    %v1851 = vpop.f32.mrb[0].mxu0
    %v1852 = vadd.f32 %v1773, %v1851
    %v1853 = vpop.f32.mrb[0].mxu0
    %1854 = vdwg.mxu0
    %v1855 = vmax.f32 %v1847, 0.0
    %v1856 = vmax.f32 %v1852, 0.0
    %v1857 = vld [vmem:[%s1 + $0x80] sm:$0xff]
    %v1858 = vld [vmem:[%s1 + $0x88] sm:$0xff]
    %v1859 = vld [vmem:[%s1 + $0x90] sm:$0xff]
    %v1860 = vld [vmem:[%s1 + $0x98] sm:$0xff]
    %v1861 = vld [vmem:[%s1 + $0xa0] sm:$0xff]
    %v1862 = vld [vmem:[%s1 + $0xa8] sm:$0xff]
    %v1863 = vld [vmem:[%s1 + $0xb0] sm:$0xff]
    %v1864 = vld [vmem:[%s1 + $0xb8] sm:$0xff]
    %v1865 = vlaneseq
    %v1866 = vshrl.u32 %v1865, 7
    %v1867 = vsub.s32 6, %v1866
    %v1868 = vrot.slane %v20, %v1867
    %vm1869 = vcmask 523264
    %v1871 = vsel %vm1869, %v1855, 0
    %v1874 = vsel %vm1869, %v1856, 0
    %1876 = vmatprep.subr.mxu0 0.0
    %1877 = vmatpush1.msra.mxu0 %v1857
    %1878 = vmatprep.subr.mxu0 0.0
    %1879 = vmatpush1.msra.mxu0 %v1858
    %1880 = vmatprep.subr.mxu0 0.0
    %1881 = vmatpush1.msra.mxu0 %v1859
    %1882 = vmatprep.subr.mxu0 0.0
    %1883 = vmatpush1.msra.mxu0 %v1860
    %1884 = vmatprep.subr.mxu0 0.0
    %1885 = vmatpush1.msra.mxu0 %v1861
    %1886 = vmatprep.subr.mxu0 0.0
    %1887 = vmatpush1.msra.mxu0 %v1862
    %1888 = vmatprep.subr.mxu0 0.0
    %1889 = vmatpush1.msra.mxu0 %v1863
    %1890 = vmatprep.subr.mxu0 0.0
    %1891 = vmatpush1.msra.mxu0 %v1864
    %1892 = vmatprep.subr.mxu0 0.0
    %1893 = vmatpush1.msra.mxu0 0.0
    %1894 = vmatprep.subr.mxu0 0.0
    %1895 = vmatpush1.msra.mxu0 0.0
    %1896 = vmatprep.subr.mxu0 0.0
    %1897 = vmatpush1.msra.mxu0 0.0
    %1898 = vmatprep.subr.mxu0 0.0
    %1899 = vmatpush1.msra.mxu0 0.0
    %1900 = vmatprep.subr.mxu0 0.0
    %1901 = vmatpush1.msra.mxu0 0.0
    %1902 = vmatprep.subr.mxu0 0.0
    %1903 = vmatpush1.msra.mxu0 0.0
    %1904 = vmatprep.subr.mxu0 0.0
    %1905 = vmatpush1.msra.mxu0 0.0
    %1906 = vmatprep.subr.mxu0 0.0
    %1907 = vmatpush1.msra.mxu0 0.0
    %1908 = vmatprep.subr.mxu0 0.0
    %1909 = vmatpush1.msra.mxu0 0.0
    %1910 = vmatprep.subr.mxu0 0.0
    %1911 = vmatpush1.msra.mxu0 0.0
    %1912 = vmatprep.subr.mxu0 0.0
    %1913 = vmatpush1.msra.mxu0 0.0
    %1914 = vmatprep.subr.mxu0 0.0
    %1915 = vmatpush1.msra.mxu0 0.0
    %1916 = vmatprep.subr.mxu0 0.0
    %1917 = vmatpush1.msra.mxu0 0.0
    %1918 = vmatprep.subr.mxu0 0.0
    %1919 = vmatpush1.msra.mxu0 0.0
    %1920 = vmatprep.subr.mxu0 0.0
    %1921 = vmatpush1.msra.mxu0 0.0
    %1922 = vmatprep.subr.mxu0 0.0
    %1923 = vmatpush1.msra.mxu0 0.0
    %1924 = vmatprep.subr.mxu0 0.0
    %1925 = vmatpush1.msra.mxu0 0.0
    %1926 = vmatprep.subr.mxu0 0.0
    %1927 = vmatpush1.msra.mxu0 0.0
    %1928 = vmatprep.subr.mxu0 0.0
    %1929 = vmatpush1.msra.mxu0 0.0
    %1930 = vmatprep.subr.mxu0 0.0
    %1931 = vmatpush1.msra.mxu0 0.0
    %1932 = vmatprep.subr.mxu0 0.0
    %1933 = vmatpush1.msra.mxu0 0.0
    %1934 = vmatprep.subr.mxu0 0.0
    %1935 = vmatpush1.msra.mxu0 0.0
    %1936 = vmatprep.subr.mxu0 0.0
    %1937 = vmatpush1.msra.mxu0 0.0
    %1938 = vmatprep.subr.mxu0 0.0
    %1939 = vmatpush1.msra.mxu0 0.0
    %1940 = vmatprep.mubr.f32.mxu0 0.0
    %1941 = vmatmul.mubr.f32.gmra.mrb[0].mxu0 %v1871
    %v1942 = vpop.f32.mrb[0].mxu0
    %v1943 = vadd.f32 %v1868, %v1942
    %v1944 = vpop.f32.mrb[0].mxu0
    %1945 = vmatprep.mubr.f32.mxu0 0.0
    %1946 = vmatmul.mubr.f32.gmra.mrb[0].mxu0 %v1874
    %v1947 = vpop.f32.mrb[0].mxu0
    %v1948 = vadd.f32 %v1868, %v1947
    %v1949 = vpop.f32.mrb[0].mxu0
    %1950 = vdwg.mxu0
    %v1951 = vadd.f32 %v1763, %v1943
    %v1952 = vadd.f32 %v1764, %v1948
    %v1953 = vsel %vm30, %v1951, 0.0
    %1954 = vadd.xlane.f32.xlu0 %v1953
    %v1955 = vpop.xlane.xlu0 %1954
    %v1956 = vsel %vm30, %v1952, 0.0
    %1957 = vadd.xlane.f32.xlu0 %v1956
    %v1958 = vpop.xlane.xlu0 %1957
    %v1959 = vmul.f32 %v1955, %v1732
    %v1960 = vmul.f32 %v1958, %v1732
    %v1961 = vsub.f32 %v1951, %v1959
    %v1962 = vsub.f32 %v1952, %v1960
    %v1963 = vmul.f32 %v1961, %v1961
    %v1964 = vmul.f32 %v1962, %v1962
    %v1965 = vsel %vm30, %v1963, 0.0
    %1966 = vadd.xlane.f32.xlu0 %v1965
    %v1967 = vpop.xlane.xlu0 %1966
    %v1968 = vsel %vm30, %v1964, 0.0
    %1969 = vadd.xlane.f32.xlu0 %v1968
    %v1970 = vpop.xlane.xlu0 %1969
    %v1971 = vmul.f32 %v1967, %v1732
    %v1972 = vmul.f32 %v1970, %v1732
    %v1973 = vadd.f32 %v1971, 1e-05
    %v1974 = vadd.f32 %v1972, 1e-05
    %v1975 = vrsqrt.pop %v1973
    %v1976 = vrsqrt.pop %v1974
    %v1977 = vmul.f32 %v1961, %v1975
    %v1978 = vmul.f32 %v1962, %v1976
    %v1979 = vlaneseq
    %v1980 = vshrl.u32 %v1979, 7
    %v1981 = vsub.s32 7, %v1980
    %v1982 = vrot.slane %v20, %v1981
    %v1983 = vmul.f32 %v1977, %v1982
    %v1984 = vmul.f32 %v1978, %v1982
    %v1985 = vlaneseq
    %v1986 = vshrl.u32 %v1985, 7
    %v1987 = vsub.s32 0, %v1986
    %v1988 = vrot.slane %v21, %v1987
    %v1989 = vadd.f32 %v1983, %v1988
    %v1990 = vadd.f32 %v1984, %v1988
    %1991 = vst.msk [vmem:[#allocation2] sm:$0xff] %vm30, %v1989
    %1992 = vst.msk [vmem:[#allocation2 + $0x8] sm:$0xff] %vm30, %v1990
    // Predicated region
    $region18: #{encoder_layer.1} parent=1 // pred_check
      _
    $region19: #{encoder_layer.1} parent=1 // pred_check_branch
      %1994 = sbr.rel (0) target = $region21
    $region20: #{encoder_layer.1} parent=1 // pred_region
      %s1996 = ssub.s32 256, 256
      %1997 = vsyncadd [#allocation3], %s1996
      %s1998 = sshll.u32 [#allocation2], 4
      %s1999 = int_to_ptr.vmem [resolvable:$true] %s1998
      %2004 = dma.vmem_to_hbm [thread:$0]  %s1999, 256, %s4, [#allocation3], 128, 128, 8
    $region21: #{encoder_layer.1} parent=1 // pred_fallthru
      _
    // Predicated region
    $region22: #{encoder_layer.1} parent=1 // pred_check
      _
    $region23: #{encoder_layer.1} parent=1 // pred_check_branch
      %2006 = sbr.rel (0) target = $region25
    $region24: #{encoder_layer.1} parent=1 // pred_region
      %2007 = dma.done [#allocation3], 256
    $region25: #{encoder_layer.1} parent=1 // pred_fallthru
      _
    %2008 = vsyncpa [#allocation3], 1

</llo_original>
